<compile_context>
chip_gen: v6e
topology: v6e:2x2x1
jax: 0.10.0
libtpu: 0.0.40
codegen_flags: <defaults>
</compile_context>

<pallas_src>
import jax
import jax.numpy as jnp
import numpy as np
from jax.experimental import pallas as pl
from jax.experimental.pallas import tpu as pltpu

HIDDEN_DIM = 32
NUM_HEAD = 4
OUT_FEAT = HIDDEN_DIM // NUM_HEAD
CLASS_NUM = 6
ROW_TILE = 512                       # packed rows per grid step
VMEM_LIMIT = 32 * 1024 * 1024        # > v5e's 16MiB scoped default, safe on v6e/v7x


def _choose_pack():
    """Logical rows folded into the lane dim: 4 -> 128 lanes (v5e MXU), 8 -> 256 (v6e/v7x)."""
    try:
        kind = jax.devices()[0].device_kind.lower()
    except Exception:
        return 4
    return 8 if ("v6" in kind or "v7" in kind) else 4


PACK = _choose_pack()
LANES = PACK * HIDDEN_DIM            # 128 or 256: every block is lane-dense


def _round_up(x, m):
    return ((x + m - 1) // m) * m


def _tile_rows(n_packed_rows):
    """(tile, padded_rows) over PACKED rows; aims for >=2 grid steps (v7x megacore)."""
    mp8 = _round_up(max(n_packed_rows, 1), 8)
    tm = min(ROW_TILE, max(8, _round_up(-(-mp8 // 2), 8)))
    return tm, _round_up(mp8, tm)


def _pack_w(w):
    """[in,out] -> block-diagonal [PACK*in, PACK*out]: packed rows stay independent."""
    return jnp.kron(jnp.eye(PACK, dtype=jnp.float32), w)


def _pack_b(b):
    return jnp.tile(b.reshape(1, -1), (1, PACK))


def _pack_rows(x, rows_padded):
    """Pad logical rows, then fold PACK consecutive rows into the lane dimension."""
    m, c = x.shape
    x = jnp.pad(x, ((0, rows_padded - m), (0, 0)))
    return x.reshape(rows_padded // PACK, PACK * c)


# ---------------- Pallas kernels ----------------

def _kq_kernel(x_ref, w_ref, b_ref, o_ref):
    # fused K|Q projection: one [LANES, 2*LANES] block-diag matmul per tile
    o_ref[...] = jnp.dot(x_ref[...], w_ref[...],
                         preferred_element_type=jnp.float32) + b_ref[...]


def _att_score_kernel(fkj_ref, fji_ref, ang_ref, dd_ref, headB_ref, spread_ref, o_ref):
    # feat = LeakyReLU(feat_kj + feat_ji + angle_emb), slope 0.01 (PyTorch default)
    fkj = fkj_ref[...]
    feat = fkj + fji_ref[...] + ang_ref[...]
    feat = jnp.where(feat >= 0.0, feat, 0.01 * feat)
    # attn weights are folded into headB (row-scaled block-diag-of-ones), so one matmul
    # does multiply-by-attn + per-head reduce + broadcast back to every lane of the head.
    s_b = jnp.dot(feat, headB_ref[...], preferred_element_type=jnp.float32)
    # dist_decay arrives narrow ([tm, PACK], one scalar per logical row); broadcast to its
    # 32-lane chunk with a tiny kron(eye(PACK), ones(1,32)) matmul (no HBM broadcast).
    dd_b = jnp.dot(dd_ref[...], spread_ref[...], preferred_element_type=jnp.float32)
    att = jnp.exp(s_b + dd_b)            # padded triplets carry dd = -1e30 -> exp == 0
    o_ref[:, :LANES] = att               # softmax numerator (per-head, lane-broadcast)
    o_ref[:, LANES:] = fkj * att         # value numerator feat_kj * att


def _out_mlp_kernel(num_ref, den_ref, bond_ref,
                    w1, b1, w2, b2,
                    ra_w, ra_b, rb_w, rb_b,
                    rc_w, rc_b, rd_w, rd_b, o_ref):
    dot = lambda x, w: jnp.dot(x, w[...], preferred_element_type=jnp.float32)
    relu = lambda x: jnp.maximum(x, 0.0)
    # The softmax denominator is constant per destination edge, so the divide happens here
    # (per edge) instead of per triplet.  Edges with no surviving contribution get 0/1 = 0,
    # matching the reference scatter-add (divergence only if exp underflows for valid rows).
    den = den_ref[...]
    v = num_ref[...] / jnp.where(den > 0.0, den, 1.0)
    x = relu(dot(v, w1) + b1[...])
    x = dot(x, w2) + b2[...] + bond_ref[...]
    h = relu(dot(x, ra_w) + ra_b[...])
    x = x + relu(dot(h, rb_w) + rb_b[...])
    h = relu(dot(x, rc_w) + rc_b[...])
    x = x + relu(dot(h, rd_w) + rd_b[...])
    o_ref[...] = x


def _row_tiled_call(kernel, row_inputs, const_inputs, out_cols, tm):
    """Run `kernel` over packed-row tiles; row_inputs are pre-padded to a multiple of tm."""
    mp = row_inputs[0].shape[0]
    in_specs = [pl.BlockSpec((tm, x.shape[1]), lambda i: (i, 0)) for x in row_inputs]
    in_specs += [pl.BlockSpec(c.shape, lambda i: (0, 0)) for c in const_inputs]
    return pl.pallas_call(
        kernel,
        out_shape=jax.ShapeDtypeStruct((mp, out_cols), jnp.float32),
        grid=(mp // tm,),
        in_specs=in_specs,
        out_specs=pl.BlockSpec((tm, out_cols), lambda i: (i, 0)),
        compiler_params=pltpu.CompilerParams(
            dimension_semantics=("parallel",),
            vmem_limit_bytes=VMEM_LIMIT),
    )(*row_inputs, *const_inputs)


# ---------------- parameters ----------------

def init_params(key):
    keys = jax.random.split(key, 32)
    it = iter(keys)

    def lin():
        return (0.1 * jax.random.normal(next(it), (HIDDEN_DIM, HIDDEN_DIM), jnp.float32),
                0.05 * jax.random.normal(next(it), (HIDDEN_DIM,), jnp.float32))

    p = {}
    p["k_w"], p["k_b"] = lin()
    p["q_w"], p["q_b"] = lin()
    p["attn"] = 0.1 * jax.random.normal(next(it), (1, HIDDEN_DIM), jnp.float32)
    p["lin1_w"], p["lin1_b"] = lin()
    p["lin2_w"], p["lin2_b"] = lin()
    p["res1a_w"], p["res1a_b"] = lin()
    p["res1b_w"], p["res1b_b"] = lin()
    p["res2a_w"], p["res2a_b"] = lin()
    p["res2b_w"], p["res2b_b"] = lin()
    p["angle_table"] = 0.1 * jax.random.normal(next(it), (CLASS_NUM, HIDDEN_DIM), jnp.float32)
    p["angle_in_w"], p["angle_in_b"] = lin()
    p["angle2_w"], p["angle2_b"] = lin()
    p["angle1_w"], p["angle1_b"] = lin()
    return p


# ---------------- forward (Pallas) ----------------

def bond2bond_forward(params, pos, bond_embedding, dist_decay,
                      index_kj, index_ji, idx_i, idx_j, idx_k):
    num_edges = bond_embedding.shape[0]
    num_trip = index_kj.shape[0]

    # --- geometry + angle binning (glue, T x 3) ---
    pos_i = pos[idx_i]
    pos_ji = pos[idx_j] - pos_i
    pos_ki = pos[idx_k] - pos_i
    a = jnp.sum(pos_ji * pos_ki, axis=-1)
    b = jnp.linalg.norm(jnp.cross(pos_ji, pos_ki), axis=-1)
    angle = jnp.arctan2(b, a)
    # clip == JAX's OOB-gather clamp the reference relies on when angle == pi (intentional)
    angle_idx = jnp.clip((angle / (3.1415926 / CLASS_NUM)).astype(jnp.int32),
                         0, CLASS_NUM - 1)

    # --- angle MLP applied ONCE to the 6-row table: tiny, plain XLA (launch > compute) ---
    P = jax.lax.Precision.HIGHEST
    relu = lambda x: jnp.maximum(x, 0.0)
    t = params["angle_table"]
    t = relu(jnp.dot(t, params["angle_in_w"], precision=P) + params["angle_in_b"])
    t = relu(jnp.dot(t, params["angle2_w"], precision=P) + params["angle2_b"])
    ang_tab = relu(jnp.dot(t, params["angle1_w"], precision=P) + params["angle1_b"])  # [6,32]

    # feat_drop / attn_drop have p=0 -> identity (omitted)

    # --- fused K|Q projection over edges (single launch, lane-packed rows) ---
    te, ep_packed = _tile_rows(-(-num_edges // PACK))
    Ep = ep_packed * PACK
    bond_pk = _pack_rows(bond_embedding, Ep)                              # [Ep/PACK, LANES]
    wkq = _pack_w(jnp.concatenate([params["k_w"], params["q_w"]], axis=1))   # [LANES, 2*LANES]
    bkq = _pack_b(jnp.concatenate([params["k_b"], params["q_b"]]))
    kq_pk = _row_tiled_call(_kq_kernel, [bond_pk], [wkq, bkq], 2 * LANES, te)
    kq = kq_pk.reshape(Ep, 2 * HIDDEN_DIM)
    feat_k = kq[:, :HIDDEN_DIM]
    feat_q = kq[:, HIDDEN_DIM:]

    # --- sort triplets by destination edge so the segment reduction is sorted ---
    perm = jnp.argsort(index_ji)
    tt, tp_packed = _tile_rows(-(-num_trip // PACK))
    Tp = tp_packed * PACK
    pad_t = Tp - num_trip
    kj_s = jnp.pad(index_kj[perm], (0, pad_t))                                   # pad -> 0
    # pad value num_edges-1 keeps the segment ids sorted; padded rows contribute exactly 0
    # to edge num_edges-1 because their dist_decay is forced to -1e30 (exp == 0).
    ji_s = jnp.pad(index_ji[perm], (0, pad_t), constant_values=num_edges - 1)
    ai_s = jnp.pad(angle_idx[perm], (0, pad_t))

    # TODO(synk): these gathers still materialize [Tp,32] arrays in HBM; for large T an
    # in-kernel jnp.take from a VMEM-resident kq/ang table (or a CSR PrefetchScalarGridSpec
    # walk that also fuses the segment sum) would remove the round trips.
    feat_kj = feat_k[kj_s]                                     # [Tp, 32]
    feat_ji = feat_q[ji_s]                                     # [Tp, 32]
    ang = ang_tab[ai_s]                                        # [Tp, 32]
    valid = (jnp.arange(Tp) < num_trip)[:, None]
    dd_col = jnp.where(valid, dist_decay[kj_s], jnp.float32(-1e30))        # [Tp, 1]

    fkj_pk = feat_kj.reshape(tp_packed, LANES)
    fji_pk = feat_ji.reshape(tp_packed, LANES)
    ang_pk = ang.reshape(tp_packed, LANES)
    dd_pk = dd_col.reshape(tp_packed, PACK)                    # narrow; broadcast in-kernel

    # attn folded into the per-head reduce+broadcast matrix: (f*a)@B == f@(diag(a)B)
    headB = params["attn"].reshape(HIDDEN_DIM, 1) * jnp.kron(
        jnp.eye(NUM_HEAD, dtype=jnp.float32), jnp.ones((OUT_FEAT, OUT_FEAT), jnp.float32))
    headB_pk = _pack_w(headB)                                  # [LANES, LANES]
    spread = jnp.kron(jnp.eye(PACK, dtype=jnp.float32),
                      jnp.ones((1, HIDDEN_DIM), jnp.float32))  # [PACK, LANES]

    # --- attention scores + value numerator in ONE launch, lane-dense [tm, 2*LANES] ---
    att_num_pk = _row_tiled_call(_att_score_kernel,
                                 [fkj_pk, fji_pk, ang_pk, dd_pk],
                                 [headB_pk, spread], 2 * LANES, tt)
    att = att_num_pk[:, :LANES].reshape(Tp, HIDDEN_DIM)
    num = att_num_pk[:, LANES:].reshape(Tp, HIDDEN_DIM)

    # --- ONE sorted segment reduction for both denominator and value numerator ---
    # TODO(synk): for large T/E replace with a Pallas CSR-walk kernel fused with the out MLP.
    seg = jax.ops.segment_sum(jnp.concatenate([att, num], axis=-1), ji_s,
                              num_segments=Ep, indices_are_sorted=True)     # [Ep, 64]
    att_all_pk = seg[:, :HIDDEN_DIM].reshape(ep_packed, LANES)
    num_sum_pk = seg[:, HIDDEN_DIM:].reshape(ep_packed, LANES)

    # --- fused: per-edge softmax divide + out MLP + both residual blocks (one launch) ---
    pw = lambda n: _pack_w(params[n + "_w"])
    pb = lambda n: _pack_b(params[n + "_b"])
    he_pk = _row_tiled_call(
        _out_mlp_kernel, [num_sum_pk, att_all_pk, bond_pk],
        [pw("lin1"), pb("lin1"), pw("lin2"), pb("lin2"),
         pw("res1a"), pb("res1a"), pw("res1b"), pb("res1b"),
         pw("res2a"), pb("res2a"), pw("res2b"), pb("res2b")],
        LANES, te)
    return he_pk.reshape(Ep, HIDDEN_DIM)[:num_edges]


# ---------------- pure-JAX reference (mirrors the PyTorch forward) ----------------

def reference_forward(params, pos, bond, dist_decay, index_kj, index_ji, idx_i, idx_j, idx_k):
    P = jax.lax.Precision.HIGHEST
    lin = lambda x, w, b: jnp.dot(x, w, precision=P) + b
    relu = lambda x: jnp.maximum(x, 0.0)

    pos_i = pos[idx_i]
    pos_ji = pos[idx_j] - pos_i
    pos_ki = pos[idx_k] - pos_i
    a = jnp.sum(pos_ji * pos_ki, -1)
    b2 = jnp.linalg.norm(jnp.cross(pos_ji, pos_ki), axis=-1)
    angle = jnp.arctan2(b2, a)
    idx = (angle / (3.1415926 / CLASS_NUM)).astype(jnp.int32)

    ang = params["angle_table"][idx]
    ang = relu(lin(ang, params["angle_in_w"], params["angle_in_b"]))
    ang = relu(lin(ang, params["angle2_w"], params["angle2_b"]))
    ang = relu(lin(ang, params["angle1_w"], params["angle1_b"])).reshape(-1, NUM_HEAD, OUT_FEAT)

    fk = lin(bond, params["k_w"], params["k_b"]).reshape(-1, NUM_HEAD, OUT_FEAT)[index_kj]
    fq = lin(bond, params["q_w"], params["q_b"]).reshape(-1, NUM_HEAD, OUT_FEAT)[index_ji]
    feat = fk + fq + ang
    feat = jnp.where(feat >= 0, feat, 0.01 * feat)
    attn3 = params["attn"].reshape(1, NUM_HEAD, OUT_FEAT)
    att = jnp.sum(feat * attn3, -1, keepdims=True)
    dd = dist_decay[index_kj][:, None, :]
    att_decay = jnp.exp(att + dd)
    num_edges = bond.shape[0]
    att_all = jnp.zeros((num_edges, NUM_HEAD, 1), jnp.float32).at[index_ji].add(att_decay)[index_ji]
    att_decay = att_decay / att_all
    v_att = (fk * att_decay).reshape(-1, HIDDEN_DIM)
    v_clone = jnp.zeros((num_edges, HIDDEN_DIM), jnp.float32).at[index_ji].add(v_att)
    he = lin(relu(lin(v_clone, params["lin1_w"], params["lin1_b"])),
             params["lin2_w"], params["lin2_b"]) + bond
    he = he + relu(lin(relu(lin(he, params["res1a_w"], params["res1a_b"])),
                       params["res1b_w"], params["res1b_b"]))
    he = he + relu(lin(relu(lin(he, params["res2a_w"], params["res2a_b"])),
                       params["res2b_w"], params["res2b_b"]))
    return he


if __name__ == "__main__":
    key = jax.random.PRNGKey(0)
    kp, k1, k2, k3, k4, k5, k6, k7, k8 = jax.random.split(key, 9)
    params = init_params(kp)

    # small, non-multiple-of-tile shapes to exercise the padding / packing paths too
    N_ATOMS, E, T = 12, 14, 27
    pos = jax.random.normal(k1, (N_ATOMS, 3), jnp.float32)
    bond = 0.5 * jax.random.normal(k2, (E, HIDDEN_DIM), jnp.float32)
    dist_decay = jax.random.uniform(k3, (E, 1), jnp.float32)
    index_kj = jax.random.randint(k4, (T,), 0, E, jnp.int32)
    index_ji = jax.random.randint(k5, (T,), 0, E, jnp.int32)
    idx_i = jax.random.randint(k6, (T,), 0, N_ATOMS, jnp.int32)
    idx_j = jax.random.randint(k7, (T,), 0, N_ATOMS, jnp.int32)
    idx_k = jax.random.randint(k8, (T,), 0, N_ATOMS, jnp.int32)

    fwd = jax.jit(bond2bond_forward)
    out = jax.block_until_ready(fwd(params, pos, bond, dist_decay,
                                    index_kj, index_ji, idx_i, idx_j, idx_k))

    ref = reference_forward(params, pos, bond, dist_decay,
                            index_kj, index_ji, idx_i, idx_j, idx_k)
    np.testing.assert_allclose(np.asarray(out), np.asarray(ref), rtol=2e-2, atol=2e-2)
    print("KERNEL_OK")
</pallas_src>

<mosaic_0001>
module attributes {stable_mosaic.version = 11 : i64} {
  func.func @_kq_kernel(%arg0: i32, %arg1: memref<8x128xf32, #tpu.memory_space<vmem>>, %arg2: memref<128x256xf32, #tpu.memory_space<vmem>>, %arg3: memref<1x256xf32, #tpu.memory_space<vmem>>, %arg4: memref<8x256xf32, #tpu.memory_space<vmem>>) attributes {dimension_semantics = [#tpu.dimension_semantics<parallel>], iteration_bounds = array<i64: 1>, scalar_prefetch = 0 : i64, scratch_operands = 0 : i64, tpu.core_type = #tpu.core_type<tc>, window_params = [{transform_indices = @transform_0, window_bounds = array<i64: 8, 128>}, {pipeline_mode = #tpu.pipeline_mode<synchronous>, transform_indices = @transform_1, window_bounds = array<i64: 128, 256>}, {pipeline_mode = #tpu.pipeline_mode<synchronous>, transform_indices = @transform_2, window_bounds = array<i64: 1, 256>}, {transform_indices = @transform_3, window_bounds = array<i64: 8, 256>}]} {
    %c0 = arith.constant 0 : index
    %c0_0 = arith.constant 0 : index
    %0 = vector.load %arg1[%c0, %c0_0] : memref<8x128xf32, #tpu.memory_space<vmem>>, vector<8x128xf32>
    %c0_1 = arith.constant 0 : index
    %c0_2 = arith.constant 0 : index
    %1 = vector.load %arg2[%c0_1, %c0_2] : memref<128x256xf32, #tpu.memory_space<vmem>>, vector<128x256xf32>
    %cst = arith.constant dense<0.000000e+00> : vector<8x256xf32>
    %2 = tpu.matmul %0, %1, %cst {dimension_numbers = #tpu.dot_dimension_numbers<[1], [0], [0], [1], [0, 0, 1, 1], [], []>} : vector<8x128xf32>, vector<128x256xf32>, vector<8x256xf32> -> vector<8x256xf32>
    %c0_3 = arith.constant 0 : index
    %c0_4 = arith.constant 0 : index
    %3 = vector.load %arg3[%c0_3, %c0_4] : memref<1x256xf32, #tpu.memory_space<vmem>>, vector<1x256xf32>
    %4 = vector.broadcast %3 : vector<1x256xf32> to vector<8x256xf32>
    %5 = arith.addf %2, %4 : vector<8x256xf32>
    %c0_5 = arith.constant 0 : index
    %c0_6 = arith.constant 0 : index
    %6 = vector.load %arg4[%c0_5, %c0_6] : memref<8x256xf32, #tpu.memory_space<vmem>>, vector<8x256xf32>
    tpu.vector_store %arg4[%c0_5, %c0_6], %5 {strides = array<i32>} : memref<8x256xf32, #tpu.memory_space<vmem>>, vector<8x256xf32>,
    return
  }
  func.func @transform_0(%arg0: i32) -> (i32, i32) {
    %c0_i32 = arith.constant 0 : i32
    %c0_i32_0 = arith.constant 0 : i32
    return %arg0, %c0_i32 : i32, i32
  }
  func.func @transform_1(%arg0: i32) -> (i32, i32) {
    %c0_i32 = arith.constant 0 : i32
    %c0_i32_0 = arith.constant 0 : i32
    %c0_i32_1 = arith.constant 0 : i32
    return %c0_i32, %c0_i32_0 : i32, i32
  }
  func.func @transform_2(%arg0: i32) -> (i32, i32) {
    %c0_i32 = arith.constant 0 : i32
    %c0_i32_0 = arith.constant 0 : i32
    %c0_i32_1 = arith.constant 0 : i32
    return %c0_i32, %c0_i32_0 : i32, i32
  }
  func.func @transform_3(%arg0: i32) -> (i32, i32) {
    %c0_i32 = arith.constant 0 : i32
    %c0_i32_0 = arith.constant 0 : i32
    return %arg0, %c0_i32 : i32, i32
  }
}

module attributes {stable_mosaic.version = 11 : i64} {
  func.func @_att_score_kernel(%arg0: i32, %arg1: memref<8x128xf32, #tpu.memory_space<vmem>>, %arg2: memref<8x128xf32, #tpu.memory_space<vmem>>, %arg3: memref<8x128xf32, #tpu.memory_space<vmem>>, %arg4: memref<8x4xf32, #tpu.memory_space<vmem>>, %arg5: memref<128x128xf32, #tpu.memory_space<vmem>>, %arg6: memref<4x128xf32, #tpu.memory_space<vmem>>, %arg7: memref<8x256xf32, #tpu.memory_space<vmem>>) attributes {dimension_semantics = [#tpu.dimension_semantics<parallel>], iteration_bounds = array<i64: 1>, scalar_prefetch = 0 : i64, scratch_operands = 0 : i64, tpu.core_type = #tpu.core_type<tc>, window_params = [{transform_indices = @transform_0, window_bounds = array<i64: 8, 128>}, {transform_indices = @transform_1, window_bounds = array<i64: 8, 128>}, {transform_indices = @transform_2, window_bounds = array<i64: 8, 128>}, {transform_indices = @transform_3, window_bounds = array<i64: 8, 4>}, {pipeline_mode = #tpu.pipeline_mode<synchronous>, transform_indices = @transform_4, window_bounds = array<i64: 128, 128>}, {pipeline_mode = #tpu.pipeline_mode<synchronous>, transform_indices = @transform_5, window_bounds = array<i64: 4, 128>}, {transform_indices = @transform_6, window_bounds = array<i64: 8, 256>}]} {
    %c0 = arith.constant 0 : index
    %c0_0 = arith.constant 0 : index
    %0 = vector.load %arg1[%c0, %c0_0] : memref<8x128xf32, #tpu.memory_space<vmem>>, vector<8x128xf32>
    %c0_1 = arith.constant 0 : index
    %c0_2 = arith.constant 0 : index
    %1 = vector.load %arg2[%c0_1, %c0_2] : memref<8x128xf32, #tpu.memory_space<vmem>>, vector<8x128xf32>
    %2 = arith.addf %0, %1 : vector<8x128xf32>
    %c0_3 = arith.constant 0 : index
    %c0_4 = arith.constant 0 : index
    %3 = vector.load %arg3[%c0_3, %c0_4] : memref<8x128xf32, #tpu.memory_space<vmem>>, vector<8x128xf32>
    %4 = arith.addf %2, %3 : vector<8x128xf32>
    %cst = arith.constant 0.000000e+00 : f32
    %5 = vector.broadcast %cst : f32 to vector<8x128xf32>
    %6 = arith.cmpf oge, %4, %5 : vector<8x128xf32>
    %cst_5 = arith.constant 0.00999999977 : f32
    %7 = vector.broadcast %cst_5 : f32 to vector<8x128xf32>
    %8 = arith.mulf %7, %4 : vector<8x128xf32>
    %9 = arith.select %6, %4, %8 : vector<8x128xi1>, vector<8x128xf32>
    %c0_6 = arith.constant 0 : index
    %c0_7 = arith.constant 0 : index
    %10 = vector.load %arg5[%c0_6, %c0_7] : memref<128x128xf32, #tpu.memory_space<vmem>>, vector<128x128xf32>
    %cst_8 = arith.constant dense<0.000000e+00> : vector<8x128xf32>
    %11 = tpu.matmul %9, %10, %cst_8 {dimension_numbers = #tpu.dot_dimension_numbers<[1], [0], [0], [1], [0, 0, 1, 1], [], []>} : vector<8x128xf32>, vector<128x128xf32>, vector<8x128xf32> -> vector<8x128xf32>
    %c0_9 = arith.constant 0 : index
    %c0_10 = arith.constant 0 : index
    %12 = vector.load %arg4[%c0_9, %c0_10] : memref<8x4xf32, #tpu.memory_space<vmem>>, vector<8x4xf32>
    %c0_11 = arith.constant 0 : index
    %c0_12 = arith.constant 0 : index
    %13 = vector.load %arg6[%c0_11, %c0_12] : memref<4x128xf32, #tpu.memory_space<vmem>>, vector<4x128xf32>
    %cst_13 = arith.constant dense<0.000000e+00> : vector<8x128xf32>
    %14 = tpu.matmul %12, %13, %cst_13 {dimension_numbers = #tpu.dot_dimension_numbers<[1], [0], [0], [1], [0, 0, 1, 1], [], []>} : vector<8x4xf32>, vector<4x128xf32>, vector<8x128xf32> -> vector<8x128xf32>
    %15 = arith.addf %11, %14 : vector<8x128xf32>
    %16 = math.exp %15 : vector<8x128xf32>
    %c0_14 = arith.constant 0 : index
    %c0_15 = arith.constant 0 : index
    %17 = vector.load %arg7[%c0_14, %c0_15] : memref<8x256xf32, #tpu.memory_space<vmem>>, vector<8x128xf32>
    tpu.vector_store %arg7[%c0_14, %c0_15], %16 {strides = array<i32>} : memref<8x256xf32, #tpu.memory_space<vmem>>, vector<8x128xf32>,
    %18 = arith.mulf %0, %16 : vector<8x128xf32>
    %c0_16 = arith.constant 0 : index
    %c128 = arith.constant 128 : index
    %19 = vector.load %arg7[%c0_16, %c128] : memref<8x256xf32, #tpu.memory_space<vmem>>, vector<8x128xf32>
    tpu.vector_store %arg7[%c0_16, %c128], %18 {strides = array<i32>} : memref<8x256xf32, #tpu.memory_space<vmem>>, vector<8x128xf32>,
    return
  }
  func.func @transform_0(%arg0: i32) -> (i32, i32) {
    %c0_i32 = arith.constant 0 : i32
    %c0_i32_0 = arith.constant 0 : i32
    return %arg0, %c0_i32 : i32, i32
  }
  func.func @transform_1(%arg0: i32) -> (i32, i32) {
    %c0_i32 = arith.constant 0 : i32
    %c0_i32_0 = arith.constant 0 : i32
    return %arg0, %c0_i32 : i32, i32
  }
  func.func @transform_2(%arg0: i32) -> (i32, i32) {
    %c0_i32 = arith.constant 0 : i32
    %c0_i32_0 = arith.constant 0 : i32
    return %arg0, %c0_i32 : i32, i32
  }
  func.func @transform_3(%arg0: i32) -> (i32, i32) {
    %c0_i32 = arith.constant 0 : i32
    %c0_i32_0 = arith.constant 0 : i32
    return %arg0, %c0_i32 : i32, i32
  }
  func.func @transform_4(%arg0: i32) -> (i32, i32) {
    %c0_i32 = arith.constant 0 : i32
    %c0_i32_0 = arith.constant 0 : i32
    %c0_i32_1 = arith.constant 0 : i32
    return %c0_i32, %c0_i32_0 : i32, i32
  }
  func.func @transform_5(%arg0: i32) -> (i32, i32) {
    %c0_i32 = arith.constant 0 : i32
    %c0_i32_0 = arith.constant 0 : i32
    %c0_i32_1 = arith.constant 0 : i32
    return %c0_i32, %c0_i32_0 : i32, i32
  }
  func.func @transform_6(%arg0: i32) -> (i32, i32) {
    %c0_i32 = arith.constant 0 : i32
    %c0_i32_0 = arith.constant 0 : i32
    return %arg0, %c0_i32 : i32, i32
  }
}

module attributes {stable_mosaic.version = 11 : i64} {
  func.func @_out_mlp_kernel(%arg0: i32, %arg1: memref<8x128xf32, #tpu.memory_space<vmem>>, %arg2: memref<8x128xf32, #tpu.memory_space<vmem>>, %arg3: memref<8x128xf32, #tpu.memory_space<vmem>>, %arg4: memref<128x128xf32, #tpu.memory_space<vmem>>, %arg5: memref<1x128xf32, #tpu.memory_space<vmem>>, %arg6: memref<128x128xf32, #tpu.memory_space<vmem>>, %arg7: memref<1x128xf32, #tpu.memory_space<vmem>>, %arg8: memref<128x128xf32, #tpu.memory_space<vmem>>, %arg9: memref<1x128xf32, #tpu.memory_space<vmem>>, %arg10: memref<128x128xf32, #tpu.memory_space<vmem>>, %arg11: memref<1x128xf32, #tpu.memory_space<vmem>>, %arg12: memref<128x128xf32, #tpu.memory_space<vmem>>, %arg13: memref<1x128xf32, #tpu.memory_space<vmem>>, %arg14: memref<128x128xf32, #tpu.memory_space<vmem>>, %arg15: memref<1x128xf32, #tpu.memory_space<vmem>>, %arg16: memref<8x128xf32, #tpu.memory_space<vmem>>) attributes {dimension_semantics = [#tpu.dimension_semantics<parallel>], iteration_bounds = array<i64: 1>, scalar_prefetch = 0 : i64, scratch_operands = 0 : i64, tpu.core_type = #tpu.core_type<tc>, window_params = [{transform_indices = @transform_0, window_bounds = array<i64: 8, 128>}, {transform_indices = @transform_1, window_bounds = array<i64: 8, 128>}, {transform_indices = @transform_2, window_bounds = array<i64: 8, 128>}, {pipeline_mode = #tpu.pipeline_mode<synchronous>, transform_indices = @transform_3, window_bounds = array<i64: 128, 128>}, {pipeline_mode = #tpu.pipeline_mode<synchronous>, transform_indices = @transform_4, window_bounds = array<i64: 1, 128>}, {pipeline_mode = #tpu.pipeline_mode<synchronous>, transform_indices = @transform_5, window_bounds = array<i64: 128, 128>}, {pipeline_mode = #tpu.pipeline_mode<synchronous>, transform_indices = @transform_6, window_bounds = array<i64: 1, 128>}, {pipeline_mode = #tpu.pipeline_mode<synchronous>, transform_indices = @transform_7, window_bounds = array<i64: 128, 128>}, {pipeline_mode = #tpu.pipeline_mode<synchronous>, transform_indices = @transform_8, window_bounds = array<i64: 1, 128>}, {pipeline_mode = #tpu.pipeline_mode<synchronous>, transform_indices = @transform_9, window_bounds = array<i64: 128, 128>}, {pipeline_mode = #tpu.pipeline_mode<synchronous>, transform_indices = @transform_10, window_bounds = array<i64: 1, 128>}, {pipeline_mode = #tpu.pipeline_mode<synchronous>, transform_indices = @transform_11, window_bounds = array<i64: 128, 128>}, {pipeline_mode = #tpu.pipeline_mode<synchronous>, transform_indices = @transform_12, window_bounds = array<i64: 1, 128>}, {pipeline_mode = #tpu.pipeline_mode<synchronous>, transform_indices = @transform_13, window_bounds = array<i64: 128, 128>}, {pipeline_mode = #tpu.pipeline_mode<synchronous>, transform_indices = @transform_14, window_bounds = array<i64: 1, 128>}, {transform_indices = @transform_15, window_bounds = array<i64: 8, 128>}]} {
    %c0 = arith.constant 0 : index
    %c0_0 = arith.constant 0 : index
    %0 = vector.load %arg2[%c0, %c0_0] : memref<8x128xf32, #tpu.memory_space<vmem>>, vector<8x128xf32>
    %c0_1 = arith.constant 0 : index
    %c0_2 = arith.constant 0 : index
    %1 = vector.load %arg1[%c0_1, %c0_2] : memref<8x128xf32, #tpu.memory_space<vmem>>, vector<8x128xf32>
    %cst = arith.constant 0.000000e+00 : f32
    %2 = vector.broadcast %cst : f32 to vector<8x128xf32>
    %3 = arith.cmpf ogt, %0, %2 : vector<8x128xf32>
    %cst_3 = arith.constant 1.000000e+00 : f32
    %4 = vector.broadcast %cst_3 : f32 to vector<8x128xf32>
    %5 = arith.select %3, %0, %4 : vector<8x128xi1>, vector<8x128xf32>
    %6 = arith.divf %1, %5 : vector<8x128xf32>
    %c0_4 = arith.constant 0 : index
    %c0_5 = arith.constant 0 : index
    %7 = vector.load %arg4[%c0_4, %c0_5] : memref<128x128xf32, #tpu.memory_space<vmem>>, vector<128x128xf32>
    %cst_6 = arith.constant dense<0.000000e+00> : vector<8x128xf32>
    %8 = tpu.matmul %6, %7, %cst_6 {dimension_numbers = #tpu.dot_dimension_numbers<[1], [0], [0], [1], [0, 0, 1, 1], [], []>} : vector<8x128xf32>, vector<128x128xf32>, vector<8x128xf32> -> vector<8x128xf32>
    %c0_7 = arith.constant 0 : index
    %c0_8 = arith.constant 0 : index
    %9 = vector.load %arg5[%c0_7, %c0_8] : memref<1x128xf32, #tpu.memory_space<vmem>>, vector<1x128xf32>
    %10 = vector.broadcast %9 : vector<1x128xf32> to vector<8x128xf32>
    %11 = arith.addf %8, %10 : vector<8x128xf32>
    %cst_9 = arith.constant 0.000000e+00 : f32
    %12 = vector.broadcast %cst_9 : f32 to vector<8x128xf32>
    %13 = arith.maximumf %11, %12 : vector<8x128xf32>
    %c0_10 = arith.constant 0 : index
    %c0_11 = arith.constant 0 : index
    %14 = vector.load %arg6[%c0_10, %c0_11] : memref<128x128xf32, #tpu.memory_space<vmem>>, vector<128x128xf32>
    %cst_12 = arith.constant dense<0.000000e+00> : vector<8x128xf32>
    %15 = tpu.matmul %13, %14, %cst_12 {dimension_numbers = #tpu.dot_dimension_numbers<[1], [0], [0], [1], [0, 0, 1, 1], [], []>} : vector<8x128xf32>, vector<128x128xf32>, vector<8x128xf32> -> vector<8x128xf32>
    %c0_13 = arith.constant 0 : index
    %c0_14 = arith.constant 0 : index
    %16 = vector.load %arg7[%c0_13, %c0_14] : memref<1x128xf32, #tpu.memory_space<vmem>>, vector<1x128xf32>
    %17 = vector.broadcast %16 : vector<1x128xf32> to vector<8x128xf32>
    %18 = arith.addf %15, %17 : vector<8x128xf32>
    %c0_15 = arith.constant 0 : index
    %c0_16 = arith.constant 0 : index
    %19 = vector.load %arg3[%c0_15, %c0_16] : memref<8x128xf32, #tpu.memory_space<vmem>>, vector<8x128xf32>
    %20 = arith.addf %18, %19 : vector<8x128xf32>
    %c0_17 = arith.constant 0 : index
    %c0_18 = arith.constant 0 : index
    %21 = vector.load %arg8[%c0_17, %c0_18] : memref<128x128xf32, #tpu.memory_space<vmem>>, vector<128x128xf32>
    %cst_19 = arith.constant dense<0.000000e+00> : vector<8x128xf32>
    %22 = tpu.matmul %20, %21, %cst_19 {dimension_numbers = #tpu.dot_dimension_numbers<[1], [0], [0], [1], [0, 0, 1, 1], [], []>} : vector<8x128xf32>, vector<128x128xf32>, vector<8x128xf32> -> vector<8x128xf32>
    %c0_20 = arith.constant 0 : index
    %c0_21 = arith.constant 0 : index
    %23 = vector.load %arg9[%c0_20, %c0_21] : memref<1x128xf32, #tpu.memory_space<vmem>>, vector<1x128xf32>
    %24 = vector.broadcast %23 : vector<1x128xf32> to vector<8x128xf32>
    %25 = arith.addf %22, %24 : vector<8x128xf32>
    %cst_22 = arith.constant 0.000000e+00 : f32
    %26 = vector.broadcast %cst_22 : f32 to vector<8x128xf32>
    %27 = arith.maximumf %25, %26 : vector<8x128xf32>
    %c0_23 = arith.constant 0 : index
    %c0_24 = arith.constant 0 : index
    %28 = vector.load %arg10[%c0_23, %c0_24] : memref<128x128xf32, #tpu.memory_space<vmem>>, vector<128x128xf32>
    %cst_25 = arith.constant dense<0.000000e+00> : vector<8x128xf32>
    %29 = tpu.matmul %27, %28, %cst_25 {dimension_numbers = #tpu.dot_dimension_numbers<[1], [0], [0], [1], [0, 0, 1, 1], [], []>} : vector<8x128xf32>, vector<128x128xf32>, vector<8x128xf32> -> vector<8x128xf32>
    %c0_26 = arith.constant 0 : index
    %c0_27 = arith.constant 0 : index
    %30 = vector.load %arg11[%c0_26, %c0_27] : memref<1x128xf32, #tpu.memory_space<vmem>>, vector<1x128xf32>
    %31 = vector.broadcast %30 : vector<1x128xf32> to vector<8x128xf32>
    %32 = arith.addf %29, %31 : vector<8x128xf32>
    %cst_28 = arith.constant 0.000000e+00 : f32
    %33 = vector.broadcast %cst_28 : f32 to vector<8x128xf32>
    %34 = arith.maximumf %32, %33 : vector<8x128xf32>
    %35 = arith.addf %20, %34 : vector<8x128xf32>
    %c0_29 = arith.constant 0 : index
    %c0_30 = arith.constant 0 : index
    %36 = vector.load %arg12[%c0_29, %c0_30] : memref<128x128xf32, #tpu.memory_space<vmem>>, vector<128x128xf32>
    %cst_31 = arith.constant dense<0.000000e+00> : vector<8x128xf32>
    %37 = tpu.matmul %35, %36, %cst_31 {dimension_numbers = #tpu.dot_dimension_numbers<[1], [0], [0], [1], [0, 0, 1, 1], [], []>} : vector<8x128xf32>, vector<128x128xf32>, vector<8x128xf32> -> vector<8x128xf32>
    %c0_32 = arith.constant 0 : index
    %c0_33 = arith.constant 0 : index
    %38 = vector.load %arg13[%c0_32, %c0_33] : memref<1x128xf32, #tpu.memory_space<vmem>>, vector<1x128xf32>
    %39 = vector.broadcast %38 : vector<1x128xf32> to vector<8x128xf32>
    %40 = arith.addf %37, %39 : vector<8x128xf32>
    %cst_34 = arith.constant 0.000000e+00 : f32
    %41 = vector.broadcast %cst_34 : f32 to vector<8x128xf32>
    %42 = arith.maximumf %40, %41 : vector<8x128xf32>
    %c0_35 = arith.constant 0 : index
    %c0_36 = arith.constant 0 : index
    %43 = vector.load %arg14[%c0_35, %c0_36] : memref<128x128xf32, #tpu.memory_space<vmem>>, vector<128x128xf32>
    %cst_37 = arith.constant dense<0.000000e+00> : vector<8x128xf32>
    %44 = tpu.matmul %42, %43, %cst_37 {dimension_numbers = #tpu.dot_dimension_numbers<[1], [0], [0], [1], [0, 0, 1, 1], [], []>} : vector<8x128xf32>, vector<128x128xf32>, vector<8x128xf32> -> vector<8x128xf32>
    %c0_38 = arith.constant 0 : index
    %c0_39 = arith.constant 0 : index
    %45 = vector.load %arg15[%c0_38, %c0_39] : memref<1x128xf32, #tpu.memory_space<vmem>>, vector<1x128xf32>
    %46 = vector.broadcast %45 : vector<1x128xf32> to vector<8x128xf32>
    %47 = arith.addf %44, %46 : vector<8x128xf32>
    %cst_40 = arith.constant 0.000000e+00 : f32
    %48 = vector.broadcast %cst_40 : f32 to vector<8x128xf32>
    %49 = arith.maximumf %47, %48 : vector<8x128xf32>
    %50 = arith.addf %35, %49 : vector<8x128xf32>
    %c0_41 = arith.constant 0 : index
    %c0_42 = arith.constant 0 : index
    %51 = vector.load %arg16[%c0_41, %c0_42] : memref<8x128xf32, #tpu.memory_space<vmem>>, vector<8x128xf32>
    tpu.vector_store %arg16[%c0_41, %c0_42], %50 {strides = array<i32>} : memref<8x128xf32, #tpu.memory_space<vmem>>, vector<8x128xf32>,
    return
  }
  func.func @transform_0(%arg0: i32) -> (i32, i32) {
    %c0_i32 = arith.constant 0 : i32
    %c0_i32_0 = arith.constant 0 : i32
    return %arg0, %c0_i32 : i32, i32
  }
  func.func @transform_1(%arg0: i32) -> (i32, i32) {
    %c0_i32 = arith.constant 0 : i32
    %c0_i32_0 = arith.constant 0 : i32
    return %arg0, %c0_i32 : i32, i32
  }
  func.func @transform_2(%arg0: i32) -> (i32, i32) {
    %c0_i32 = arith.constant 0 : i32
    %c0_i32_0 = arith.constant 0 : i32
    return %arg0, %c0_i32 : i32, i32
  }
  func.func @transform_3(%arg0: i32) -> (i32, i32) {
    %c0_i32 = arith.constant 0 : i32
    %c0_i32_0 = arith.constant 0 : i32
    %c0_i32_1 = arith.constant 0 : i32
    return %c0_i32, %c0_i32_0 : i32, i32
  }
  func.func @transform_4(%arg0: i32) -> (i32, i32) {
    %c0_i32 = arith.constant 0 : i32
    %c0_i32_0 = arith.constant 0 : i32
    %c0_i32_1 = arith.constant 0 : i32
    return %c0_i32, %c0_i32_0 : i32, i32
  }
  func.func @transform_5(%arg0: i32) -> (i32, i32) {
    %c0_i32 = arith.constant 0 : i32
    %c0_i32_0 = arith.constant 0 : i32
    %c0_i32_1 = arith.constant 0 : i32
    return %c0_i32, %c0_i32_0 : i32, i32
  }
  func.func @transform_6(%arg0: i32) -> (i32, i32) {
    %c0_i32 = arith.constant 0 : i32
    %c0_i32_0 = arith.constant 0 : i32
    %c0_i32_1 = arith.constant 0 : i32
    return %c0_i32, %c0_i32_0 : i32, i32
  }
  func.func @transform_7(%arg0: i32) -> (i32, i32) {
    %c0_i32 = arith.constant 0 : i32
    %c0_i32_0 = arith.constant 0 : i32
    %c0_i32_1 = arith.constant 0 : i32
    return %c0_i32, %c0_i32_0 : i32, i32
  }
  func.func @transform_8(%arg0: i32) -> (i32, i32) {
    %c0_i32 = arith.constant 0 : i32
    %c0_i32_0 = arith.constant 0 : i32
    %c0_i32_1 = arith.constant 0 : i32
    return %c0_i32, %c0_i32_0 : i32, i32
  }
  func.func @transform_9(%arg0: i32) -> (i32, i32) {
    %c0_i32 = arith.constant 0 : i32
    %c0_i32_0 = arith.constant 0 : i32
    %c0_i32_1 = arith.constant 0 : i32
    return %c0_i32, %c0_i32_0 : i32, i32
  }
  func.func @transform_10(%arg0: i32) -> (i32, i32) {
    %c0_i32 = arith.constant 0 : i32
    %c0_i32_0 = arith.constant 0 : i32
    %c0_i32_1 = arith.constant 0 : i32
    return %c0_i32, %c0_i32_0 : i32, i32
  }
  func.func @transform_11(%arg0: i32) -> (i32, i32) {
    %c0_i32 = arith.constant 0 : i32
    %c0_i32_0 = arith.constant 0 : i32
    %c0_i32_1 = arith.constant 0 : i32
    return %c0_i32, %c0_i32_0 : i32, i32
  }
  func.func @transform_12(%arg0: i32) -> (i32, i32) {
    %c0_i32 = arith.constant 0 : i32
    %c0_i32_0 = arith.constant 0 : i32
    %c0_i32_1 = arith.constant 0 : i32
    return %c0_i32, %c0_i32_0 : i32, i32
  }
  func.func @transform_13(%arg0: i32) -> (i32, i32) {
    %c0_i32 = arith.constant 0 : i32
    %c0_i32_0 = arith.constant 0 : i32
    %c0_i32_1 = arith.constant 0 : i32
    return %c0_i32, %c0_i32_0 : i32, i32
  }
  func.func @transform_14(%arg0: i32) -> (i32, i32) {
    %c0_i32 = arith.constant 0 : i32
    %c0_i32_0 = arith.constant 0 : i32
    %c0_i32_1 = arith.constant 0 : i32
    return %c0_i32, %c0_i32_0 : i32, i32
  }
  func.func @transform_15(%arg0: i32) -> (i32, i32) {
    %c0_i32 = arith.constant 0 : i32
    %c0_i32_0 = arith.constant 0 : i32
    return %arg0, %c0_i32 : i32, i32
  }
}

</mosaic_0001>

<llo_original>
// kernel: bond2bond_forward.3
$region0: #{bond2bond_forward.3}
  #allocation0 [shape = 'u32[]', space=smem, size = 0x4, offset = 0x4, fixed_abs, tag = 'smem constant byte address 0x4 - core index']
  #allocation1 [shape = 'u32[144,128]{1,0:T(1,128)}', space=vmem, size = 0x12000, scoped, tag = 'internal scratch']
  %s0 = inlined_call_operand.vmem [shape: f32[8,128], index: 0, kind: input, shape index: {}]
  %s1 = inlined_call_operand.vmem [shape: f32[128,256], index: 1, kind: input, shape index: {}]
  %s2 = inlined_call_operand.vmem [shape: f32[1,256], index: 2, kind: input, shape index: {}]
  %s3 = inlined_call_operand.vmem [shape: f32[8,256], index: 3, kind: output, shape index: {}]
  %s4 = sld [smem:[#allocation0]]
  $region22: #{bond2bond_forward.3} parent=0
    _
  %s6 = ssub.s32 1, %s4
  %s7 = scalar_select 0, %s6, %s4
  // Predicated region
  $region2: #{bond2bond_forward.3} parent=0 // pred_check
    _
  $region3: #{bond2bond_forward.3} parent=0 // pred_check_branch
    %9 = sbr.rel (0) target = $region5
  $region4: #{bond2bond_forward.3} parent=0 // pred_region
    _
  $region5: #{bond2bond_forward.3} parent=0 // pred_fallthru
    _
  // Predicated region
  $region6: #{bond2bond_forward.3} parent=0 // pred_check
    _
  $region7: #{bond2bond_forward.3} parent=0 // pred_check_branch
    %11 = sbr.rel (0) target = $region9
  $region8: #{bond2bond_forward.3} parent=0 // pred_region
    _
  $region9: #{bond2bond_forward.3} parent=0 // pred_fallthru
    _
  // Predicated region
  $region10: #{bond2bond_forward.3} parent=0 // pred_check
    _
  $region11: #{bond2bond_forward.3} parent=0 // pred_check_branch
    %13 = sbr.rel (0) target = $region13
  $region12: #{bond2bond_forward.3} parent=0 // pred_region
    _
  $region13: #{bond2bond_forward.3} parent=0 // pred_fallthru
    _
  %v14 = vld [vmem:[%s0] sm:$0xff]
  %v15 = vld [vmem:[%s1] sm:$0xff]
  %v16 = vld [vmem:[%s1 + $0x8] sm:$0xff]
  %v17 = vld [vmem:[%s1 + $0x10] sm:$0xff]
  %v18 = vld [vmem:[%s1 + $0x18] sm:$0xff]
  %v19 = vld [vmem:[%s1 + $0x20] sm:$0xff]
  %v20 = vld [vmem:[%s1 + $0x28] sm:$0xff]
  %v21 = vld [vmem:[%s1 + $0x30] sm:$0xff]
  %v22 = vld [vmem:[%s1 + $0x38] sm:$0xff]
  %v23 = vld [vmem:[%s1 + $0x40] sm:$0xff]
  %v24 = vld [vmem:[%s1 + $0x48] sm:$0xff]
  %v25 = vld [vmem:[%s1 + $0x50] sm:$0xff]
  %v26 = vld [vmem:[%s1 + $0x58] sm:$0xff]
  %v27 = vld [vmem:[%s1 + $0x60] sm:$0xff]
  %v28 = vld [vmem:[%s1 + $0x68] sm:$0xff]
  %v29 = vld [vmem:[%s1 + $0x70] sm:$0xff]
  %v30 = vld [vmem:[%s1 + $0x78] sm:$0xff]
  %v31 = vld [vmem:[%s1 + $0x80] sm:$0xff]
  %v32 = vld [vmem:[%s1 + $0x88] sm:$0xff]
  %v33 = vld [vmem:[%s1 + $0x90] sm:$0xff]
  %v34 = vld [vmem:[%s1 + $0x98] sm:$0xff]
  %v35 = vld [vmem:[%s1 + $0xa0] sm:$0xff]
  %v36 = vld [vmem:[%s1 + $0xa8] sm:$0xff]
  %v37 = vld [vmem:[%s1 + $0xb0] sm:$0xff]
  %v38 = vld [vmem:[%s1 + $0xb8] sm:$0xff]
  %v39 = vld [vmem:[%s1 + $0xc0] sm:$0xff]
  %v40 = vld [vmem:[%s1 + $0xc8] sm:$0xff]
  %v41 = vld [vmem:[%s1 + $0xd0] sm:$0xff]
  %v42 = vld [vmem:[%s1 + $0xd8] sm:$0xff]
  %v43 = vld [vmem:[%s1 + $0xe0] sm:$0xff]
  %v44 = vld [vmem:[%s1 + $0xe8] sm:$0xff]
  %v45 = vld [vmem:[%s1 + $0xf0] sm:$0xff]
  %v46 = vld [vmem:[%s1 + $0xf8] sm:$0xff]
  %v47 = vld [vmem:[%s2] sm:$0x3]
  %v49 = vlaneseq
  %v50 = vshrl.u32 %v49, 7
  %v51 = vsub.s32 0, %v50
  %v52 = vrot.slane %v47, %v51
  %v53 = vlaneseq
  %v54 = vshrl.u32 %v53, 7
  %v55 = vsub.s32 1, %v54
  %v56 = vrot.slane %v47, %v55
  %59 = vmatprep.subr.mxu0 %v46
  %60 = vmatpush1.msra.mxu0 %v45
  %61 = vmatprep.subr.mxu0 %v44
  %62 = vmatpush1.msra.mxu0 %v43
  %63 = vmatprep.subr.mxu0 %v42
  %64 = vmatpush1.msra.mxu0 %v41
  %65 = vmatprep.subr.mxu0 %v40
  %66 = vmatpush1.msra.mxu0 %v39
  %67 = vmatprep.subr.mxu0 %v38
  %68 = vmatpush1.msra.mxu0 %v37
  %69 = vmatprep.subr.mxu0 %v36
  %70 = vmatpush1.msra.mxu0 %v35
  %71 = vmatprep.subr.mxu0 %v34
  %72 = vmatpush1.msra.mxu0 %v33
  %73 = vmatprep.subr.mxu0 %v32
  %74 = vmatpush1.msra.mxu0 %v31
  %75 = vmatprep.subr.mxu0 %v30
  %76 = vmatpush1.msra.mxu0 %v29
  %77 = vmatprep.subr.mxu0 %v28
  %78 = vmatpush1.msra.mxu0 %v27
  %79 = vmatprep.subr.mxu0 %v26
  %80 = vmatpush1.msra.mxu0 %v25
  %81 = vmatprep.subr.mxu0 %v24
  %82 = vmatpush1.msra.mxu0 %v23
  %83 = vmatprep.subr.mxu0 %v22
  %84 = vmatpush1.msra.mxu0 %v21
  %85 = vmatprep.subr.mxu0 %v20
  %86 = vmatpush1.msra.mxu0 %v19
  %87 = vmatprep.subr.mxu0 %v18
  %88 = vmatpush1.msra.mxu0 %v17
  %89 = vmatprep.subr.mxu0 %v16
  %90 = vmatpush1.msra.mxu0 %v15
  %91 = vmatprep.subr.mxu0 0.0
  %92 = vmatpush2.msra.mxu0 0.0
  %93 = vmatprep.subr.mxu0 0.0
  %94 = vmatpush2.msra.mxu0 0.0
  %95 = vmatprep.subr.mxu0 0.0
  %96 = vmatpush2.msra.mxu0 0.0
  %97 = vmatprep.subr.mxu0 0.0
  %98 = vmatpush2.msra.mxu0 0.0
  %99 = vmatprep.subr.mxu0 0.0
  %100 = vmatpush2.msra.mxu0 0.0
  %101 = vmatprep.subr.mxu0 0.0
  %102 = vmatpush2.msra.mxu0 0.0
  %103 = vmatprep.subr.mxu0 0.0
  %104 = vmatpush2.msra.mxu0 0.0
  %105 = vmatprep.subr.mxu0 0.0
  %106 = vmatpush2.msra.mxu0 0.0
  %107 = vmatprep.subr.mxu0 0.0
  %108 = vmatpush2.msra.mxu0 0.0
  %109 = vmatprep.subr.mxu0 0.0
  %110 = vmatpush2.msra.mxu0 0.0
  %111 = vmatprep.subr.mxu0 0.0
  %112 = vmatpush2.msra.mxu0 0.0
  %113 = vmatprep.subr.mxu0 0.0
  %114 = vmatpush2.msra.mxu0 0.0
  %115 = vmatprep.subr.mxu0 0.0
  %116 = vmatpush2.msra.mxu0 0.0
  %117 = vmatprep.subr.mxu0 0.0
  %118 = vmatpush2.msra.mxu0 0.0
  %119 = vmatprep.subr.mxu0 0.0
  %120 = vmatpush2.msra.mxu0 0.0
  %121 = vmatprep.subr.mxu0 0.0
  %122 = vmatpush2.msra.mxu0 0.0
  %123 = vmatprep.mubr.f32.mxu0 0.0
  %124 = vmatmul.mubr.f32.gmra.mxu0 %v14
  %v125 = vpop.f32.mrf.mxu0
  %v126 = vadd.f32 %v52, %v125
  %v127 = vpop.f32.mrf.mxu0
  %v128 = vadd.f32 %v56, %v127
  %129 = vdwg.mxu0
  %130 = vst [vmem:[%s3] sm:$0xff] %v126
  %131 = vst [vmem:[%s3 + $0x8] sm:$0xff] %v128
  // Predicated region
  $region14: #{bond2bond_forward.3} parent=0 // pred_check
    _
  $region15: #{bond2bond_forward.3} parent=0 // pred_check_branch
    %133 = sbr.rel (0) target = $region17
  $region16: #{bond2bond_forward.3} parent=0 // pred_region
    _
  $region17: #{bond2bond_forward.3} parent=0 // pred_fallthru
    _
  // Predicated region
  $region18: #{bond2bond_forward.3} parent=0 // pred_check
    _
  $region19: #{bond2bond_forward.3} parent=0 // pred_check_branch
    %135 = sbr.rel (0) target = $region21
  $region20: #{bond2bond_forward.3} parent=0 // pred_region
    _
  $region21: #{bond2bond_forward.3} parent=0 // pred_fallthru
    _

// kernel: bond2bond_forward.4
$region0: #{bond2bond_forward.4}
  #allocation0 [shape = 'u32[]', space=smem, size = 0x4, offset = 0x4, fixed_abs, tag = 'smem constant byte address 0x4 - core index']
  #allocation1 [shape = 'u32[144,128]{1,0:T(1,128)}', space=vmem, size = 0x12000, scoped, tag = 'internal scratch']
  %s0 = inlined_call_operand.vmem [shape: f32[8,128], index: 0, kind: input, shape index: {}]
  %s1 = inlined_call_operand.vmem [shape: f32[8,128], index: 1, kind: input, shape index: {}]
  %s2 = inlined_call_operand.vmem [shape: f32[8,128], index: 2, kind: input, shape index: {}]
  %s3 = inlined_call_operand.vmem [shape: f32[8,4], index: 3, kind: input, shape index: {}]
  %s4 = inlined_call_operand.vmem [shape: f32[128,128], index: 4, kind: input, shape index: {}]
  %s5 = inlined_call_operand.vmem [shape: f32[4,128], index: 5, kind: input, shape index: {}]
  %s6 = inlined_call_operand.vmem [shape: f32[8,256], index: 6, kind: output, shape index: {}]
  %s7 = sld [smem:[#allocation0]]
  $region34: #{bond2bond_forward.4} parent=0
    _
  %s9 = ssub.s32 1, %s7
  %s10 = scalar_select 0, %s9, %s7
  // Predicated region
  $region2: #{bond2bond_forward.4} parent=0 // pred_check
    _
  $region3: #{bond2bond_forward.4} parent=0 // pred_check_branch
    %12 = sbr.rel (0) target = $region5
  $region4: #{bond2bond_forward.4} parent=0 // pred_region
    _
  $region5: #{bond2bond_forward.4} parent=0 // pred_fallthru
    _
  // Predicated region
  $region6: #{bond2bond_forward.4} parent=0 // pred_check
    _
  $region7: #{bond2bond_forward.4} parent=0 // pred_check_branch
    %14 = sbr.rel (0) target = $region9
  $region8: #{bond2bond_forward.4} parent=0 // pred_region
    _
  $region9: #{bond2bond_forward.4} parent=0 // pred_fallthru
    _
  // Predicated region
  $region10: #{bond2bond_forward.4} parent=0 // pred_check
    _
  $region11: #{bond2bond_forward.4} parent=0 // pred_check_branch
    %16 = sbr.rel (0) target = $region13
  $region12: #{bond2bond_forward.4} parent=0 // pred_region
    _
  $region13: #{bond2bond_forward.4} parent=0 // pred_fallthru
    _
  // Predicated region
  $region14: #{bond2bond_forward.4} parent=0 // pred_check
    _
  $region15: #{bond2bond_forward.4} parent=0 // pred_check_branch
    %18 = sbr.rel (0) target = $region17
  $region16: #{bond2bond_forward.4} parent=0 // pred_region
    _
  $region17: #{bond2bond_forward.4} parent=0 // pred_fallthru
    _
  // Predicated region
  $region18: #{bond2bond_forward.4} parent=0 // pred_check
    _
  $region19: #{bond2bond_forward.4} parent=0 // pred_check_branch
    %20 = sbr.rel (0) target = $region21
  $region20: #{bond2bond_forward.4} parent=0 // pred_region
    _
  $region21: #{bond2bond_forward.4} parent=0 // pred_fallthru
    _
  // Predicated region
  $region22: #{bond2bond_forward.4} parent=0 // pred_check
    _
  $region23: #{bond2bond_forward.4} parent=0 // pred_check_branch
    %22 = sbr.rel (0) target = $region25
  $region24: #{bond2bond_forward.4} parent=0 // pred_region
    _
  $region25: #{bond2bond_forward.4} parent=0 // pred_fallthru
    _
  %v23 = vld [vmem:[%s0] sm:$0xff]
  %v24 = vld [vmem:[%s1] sm:$0xff]
  %v25 = vadd.f32 %v23, %v24
  %v26 = vld [vmem:[%s2] sm:$0xff]
  %v27 = vadd.f32 %v25, %v26
  %vm28 = vcmp.ge.f32.partialorder %v27, 0.0
  %v29 = vmul.f32 %v27, 0.01
  %v30 = vsel %vm28, %v27, %v29
  %v31 = vld [vmem:[%s4] sm:$0xff]
  %v32 = vld [vmem:[%s4 + $0x8] sm:$0xff]
  %v33 = vld [vmem:[%s4 + $0x10] sm:$0xff]
  %v34 = vld [vmem:[%s4 + $0x18] sm:$0xff]
  %v35 = vld [vmem:[%s4 + $0x20] sm:$0xff]
  %v36 = vld [vmem:[%s4 + $0x28] sm:$0xff]
  %v37 = vld [vmem:[%s4 + $0x30] sm:$0xff]
  %v38 = vld [vmem:[%s4 + $0x38] sm:$0xff]
  %v39 = vld [vmem:[%s4 + $0x40] sm:$0xff]
  %v40 = vld [vmem:[%s4 + $0x48] sm:$0xff]
  %v41 = vld [vmem:[%s4 + $0x50] sm:$0xff]
  %v42 = vld [vmem:[%s4 + $0x58] sm:$0xff]
  %v43 = vld [vmem:[%s4 + $0x60] sm:$0xff]
  %v44 = vld [vmem:[%s4 + $0x68] sm:$0xff]
  %v45 = vld [vmem:[%s4 + $0x70] sm:$0xff]
  %v46 = vld [vmem:[%s4 + $0x78] sm:$0xff]
  %v47 = vld [vmem:[%s3] sm:$0xff]
  %v48 = vld [vmem:[%s5] sm:$0xf]
  %vm49 = vcmask 31744
  %v51 = vsel %vm49, %v47, 0
  %vm53 = vcmask 1043456
  %v55 = vsel %vm53, %v48, 0
  %57 = vmatprep.subr.mxu0 0.0
  %58 = vmatpush1.msra.mxu0 0.0
  %59 = vmatprep.subr.mxu0 0.0
  %60 = vmatpush1.msra.mxu0 0.0
  %61 = vmatprep.subr.mxu0 0.0
  %62 = vmatpush1.msra.mxu0 0.0
  %63 = vmatprep.subr.mxu0 0.0
  %64 = vmatpush1.msra.mxu0 0.0
  %65 = vmatprep.subr.mxu0 0.0
  %66 = vmatpush1.msra.mxu0 0.0
  %67 = vmatprep.subr.mxu0 0.0
  %68 = vmatpush1.msra.mxu0 0.0
  %69 = vmatprep.subr.mxu0 0.0
  %70 = vmatpush1.msra.mxu0 0.0
  %71 = vmatprep.subr.mxu0 0.0
  %72 = vmatpush1.msra.mxu0 0.0
  %73 = vmatprep.subr.mxu0 0.0
  %74 = vmatpush1.msra.mxu0 0.0
  %75 = vmatprep.subr.mxu0 0.0
  %76 = vmatpush1.msra.mxu0 0.0
  %77 = vmatprep.subr.mxu0 0.0
  %78 = vmatpush1.msra.mxu0 0.0
  %79 = vmatprep.subr.mxu0 0.0
  %80 = vmatpush1.msra.mxu0 0.0
  %81 = vmatprep.subr.mxu0 0.0
  %82 = vmatpush1.msra.mxu0 0.0
  %83 = vmatprep.subr.mxu0 0.0
  %84 = vmatpush1.msra.mxu0 0.0
  %85 = vmatprep.subr.mxu0 0.0
  %86 = vmatpush1.msra.mxu0 0.0
  %87 = vmatprep.subr.mxu0 0.0
  %88 = vmatpush1.msra.mxu0 %v55
  %89 = vmatprep.subr.mxu0 0.0
  %90 = vmatpush2.msra.mxu0 0.0
  %91 = vmatprep.subr.mxu0 0.0
  %92 = vmatpush2.msra.mxu0 0.0
  %93 = vmatprep.subr.mxu0 0.0
  %94 = vmatpush2.msra.mxu0 0.0
  %95 = vmatprep.subr.mxu0 0.0
  %96 = vmatpush2.msra.mxu0 0.0
  %97 = vmatprep.subr.mxu0 0.0
  %98 = vmatpush2.msra.mxu0 0.0
  %99 = vmatprep.subr.mxu0 0.0
  %100 = vmatpush2.msra.mxu0 0.0
  %101 = vmatprep.subr.mxu0 0.0
  %102 = vmatpush2.msra.mxu0 0.0
  %103 = vmatprep.subr.mxu0 0.0
  %104 = vmatpush2.msra.mxu0 0.0
  %105 = vmatprep.subr.mxu0 0.0
  %106 = vmatpush2.msra.mxu0 0.0
  %107 = vmatprep.subr.mxu0 0.0
  %108 = vmatpush2.msra.mxu0 0.0
  %109 = vmatprep.subr.mxu0 0.0
  %110 = vmatpush2.msra.mxu0 0.0
  %111 = vmatprep.subr.mxu0 0.0
  %112 = vmatpush2.msra.mxu0 0.0
  %113 = vmatprep.subr.mxu0 0.0
  %114 = vmatpush2.msra.mxu0 0.0
  %115 = vmatprep.subr.mxu0 0.0
  %116 = vmatpush2.msra.mxu0 0.0
  %117 = vmatprep.subr.mxu0 0.0
  %118 = vmatpush2.msra.mxu0 0.0
  %119 = vmatprep.subr.mxu0 0.0
  %120 = vmatpush2.msra.mxu0 0.0
  %121 = vmatprep.mubr.f32.mxu0 0.0
  %122 = vmatmul.mubr.f32.gmra.mxu0 %v51
  %v123 = vpop.f32.mrf.mxu0
  %v124 = vadd.f32 0.0, %v123
  %v125 = vpop.f32.mrf.mxu0
  %126 = vdwg.mxu0
  %127 = vmatprep.subr.mxu0 0.0
  %128 = vmatpush1.msra.mxu0 %v46
  %129 = vmatprep.subr.mxu0 0.0
  %130 = vmatpush1.msra.mxu0 %v45
  %131 = vmatprep.subr.mxu0 0.0
  %132 = vmatpush1.msra.mxu0 %v44
  %133 = vmatprep.subr.mxu0 0.0
  %134 = vmatpush1.msra.mxu0 %v43
  %135 = vmatprep.subr.mxu0 0.0
  %136 = vmatpush1.msra.mxu0 %v42
  %137 = vmatprep.subr.mxu0 0.0
  %138 = vmatpush1.msra.mxu0 %v41
  %139 = vmatprep.subr.mxu0 0.0
  %140 = vmatpush1.msra.mxu0 %v40
  %141 = vmatprep.subr.mxu0 0.0
  %142 = vmatpush1.msra.mxu0 %v39
  %143 = vmatprep.subr.mxu0 0.0
  %144 = vmatpush1.msra.mxu0 %v38
  %145 = vmatprep.subr.mxu0 0.0
  %146 = vmatpush1.msra.mxu0 %v37
  %147 = vmatprep.subr.mxu0 0.0
  %148 = vmatpush1.msra.mxu0 %v36
  %149 = vmatprep.subr.mxu0 0.0
  %150 = vmatpush1.msra.mxu0 %v35
  %151 = vmatprep.subr.mxu0 0.0
  %152 = vmatpush1.msra.mxu0 %v34
  %153 = vmatprep.subr.mxu0 0.0
  %154 = vmatpush1.msra.mxu0 %v33
  %155 = vmatprep.subr.mxu0 0.0
  %156 = vmatpush1.msra.mxu0 %v32
  %157 = vmatprep.subr.mxu0 0.0
  %158 = vmatpush1.msra.mxu0 %v31
  %159 = vmatprep.subr.mxu0 0.0
  %160 = vmatpush2.msra.mxu0 0.0
  %161 = vmatprep.subr.mxu0 0.0
  %162 = vmatpush2.msra.mxu0 0.0
  %163 = vmatprep.subr.mxu0 0.0
  %164 = vmatpush2.msra.mxu0 0.0
  %165 = vmatprep.subr.mxu0 0.0
  %166 = vmatpush2.msra.mxu0 0.0
  %167 = vmatprep.subr.mxu0 0.0
  %168 = vmatpush2.msra.mxu0 0.0
  %169 = vmatprep.subr.mxu0 0.0
  %170 = vmatpush2.msra.mxu0 0.0
  %171 = vmatprep.subr.mxu0 0.0
  %172 = vmatpush2.msra.mxu0 0.0
  %173 = vmatprep.subr.mxu0 0.0
  %174 = vmatpush2.msra.mxu0 0.0
  %175 = vmatprep.subr.mxu0 0.0
  %176 = vmatpush2.msra.mxu0 0.0
  %177 = vmatprep.subr.mxu0 0.0
  %178 = vmatpush2.msra.mxu0 0.0
  %179 = vmatprep.subr.mxu0 0.0
  %180 = vmatpush2.msra.mxu0 0.0
  %181 = vmatprep.subr.mxu0 0.0
  %182 = vmatpush2.msra.mxu0 0.0
  %183 = vmatprep.subr.mxu0 0.0
  %184 = vmatpush2.msra.mxu0 0.0
  %185 = vmatprep.subr.mxu0 0.0
  %186 = vmatpush2.msra.mxu0 0.0
  %187 = vmatprep.subr.mxu0 0.0
  %188 = vmatpush2.msra.mxu0 0.0
  %189 = vmatprep.subr.mxu0 0.0
  %190 = vmatpush2.msra.mxu0 0.0
  %191 = vmatprep.mubr.f32.mxu0 0.0
  %192 = vmatmul.mubr.f32.gmra.mxu0 %v30
  %v193 = vpop.f32.mrf.mxu0
  %v194 = vadd.f32 %v124, %v193
  %v195 = vpop.f32.mrf.mxu0
  %196 = vdwg.mxu0
  %v197 = vmul.f32 %v194, 1.442695
  %v198 = vpow.pop %v197
  %199 = vst [vmem:[%s6] sm:$0xff] %v198
  %v200 = vmul.f32 %v23, %v198
  %201 = vst [vmem:[%s6 + $0x8] sm:$0xff] %v200
  // Predicated region
  $region26: #{bond2bond_forward.4} parent=0 // pred_check
    _
  $region27: #{bond2bond_forward.4} parent=0 // pred_check_branch
    %203 = sbr.rel (0) target = $region29
  $region28: #{bond2bond_forward.4} parent=0 // pred_region
    _
  $region29: #{bond2bond_forward.4} parent=0 // pred_fallthru
    _
  // Predicated region
  $region30: #{bond2bond_forward.4} parent=0 // pred_check
    _
  $region31: #{bond2bond_forward.4} parent=0 // pred_check_branch
    %205 = sbr.rel (0) target = $region33
  $region32: #{bond2bond_forward.4} parent=0 // pred_region
    _
  $region33: #{bond2bond_forward.4} parent=0 // pred_fallthru
    _

// kernel: bond2bond_forward.5
$region0: #{bond2bond_forward.5}
  #allocation0 [shape = 'u32[]', space=smem, size = 0x4, offset = 0x4, fixed_abs, tag = 'smem constant byte address 0x4 - core index']
  #allocation1 [shape = 'u32[144,128]{1,0:T(1,128)}', space=vmem, size = 0x12000, scoped, tag = 'internal scratch']
  %s0 = inlined_call_operand.vmem [shape: f32[8,128], index: 0, kind: input, shape index: {}]
  %s1 = inlined_call_operand.vmem [shape: f32[8,128], index: 1, kind: input, shape index: {}]
  %s2 = inlined_call_operand.vmem [shape: f32[8,128], index: 2, kind: input, shape index: {}]
  %s3 = inlined_call_operand.vmem [shape: f32[128,128], index: 3, kind: input, shape index: {}]
  %s4 = inlined_call_operand.vmem [shape: f32[1,128], index: 4, kind: input, shape index: {}]
  %s5 = inlined_call_operand.vmem [shape: f32[128,128], index: 5, kind: input, shape index: {}]
  %s6 = inlined_call_operand.vmem [shape: f32[1,128], index: 6, kind: input, shape index: {}]
  %s7 = inlined_call_operand.vmem [shape: f32[128,128], index: 7, kind: input, shape index: {}]
  %s8 = inlined_call_operand.vmem [shape: f32[1,128], index: 8, kind: input, shape index: {}]
  %s9 = inlined_call_operand.vmem [shape: f32[128,128], index: 9, kind: input, shape index: {}]
  %s10 = inlined_call_operand.vmem [shape: f32[1,128], index: 10, kind: input, shape index: {}]
  %s11 = inlined_call_operand.vmem [shape: f32[128,128], index: 11, kind: input, shape index: {}]
  %s12 = inlined_call_operand.vmem [shape: f32[1,128], index: 12, kind: input, shape index: {}]
  %s13 = inlined_call_operand.vmem [shape: f32[128,128], index: 13, kind: input, shape index: {}]
  %s14 = inlined_call_operand.vmem [shape: f32[1,128], index: 14, kind: input, shape index: {}]
  %s15 = inlined_call_operand.vmem [shape: f32[8,128], index: 15, kind: output, shape index: {}]
  %s16 = sld [smem:[#allocation0]]
  $region70: #{bond2bond_forward.5} parent=0
    _
  %s18 = ssub.s32 1, %s16
  %s19 = scalar_select 0, %s18, %s16
  // Predicated region
  $region2: #{bond2bond_forward.5} parent=0 // pred_check
    _
  $region3: #{bond2bond_forward.5} parent=0 // pred_check_branch
    %21 = sbr.rel (0) target = $region5
  $region4: #{bond2bond_forward.5} parent=0 // pred_region
    _
  $region5: #{bond2bond_forward.5} parent=0 // pred_fallthru
    _
  // Predicated region
  $region6: #{bond2bond_forward.5} parent=0 // pred_check
    _
  $region7: #{bond2bond_forward.5} parent=0 // pred_check_branch
    %23 = sbr.rel (0) target = $region9
  $region8: #{bond2bond_forward.5} parent=0 // pred_region
    _
  $region9: #{bond2bond_forward.5} parent=0 // pred_fallthru
    _
  // Predicated region
  $region10: #{bond2bond_forward.5} parent=0 // pred_check
    _
  $region11: #{bond2bond_forward.5} parent=0 // pred_check_branch
    %25 = sbr.rel (0) target = $region13
  $region12: #{bond2bond_forward.5} parent=0 // pred_region
    _
  $region13: #{bond2bond_forward.5} parent=0 // pred_fallthru
    _
  // Predicated region
  $region14: #{bond2bond_forward.5} parent=0 // pred_check
    _
  $region15: #{bond2bond_forward.5} parent=0 // pred_check_branch
    %27 = sbr.rel (0) target = $region17
  $region16: #{bond2bond_forward.5} parent=0 // pred_region
    _
  $region17: #{bond2bond_forward.5} parent=0 // pred_fallthru
    _
  // Predicated region
  $region18: #{bond2bond_forward.5} parent=0 // pred_check
    _
  $region19: #{bond2bond_forward.5} parent=0 // pred_check_branch
    %29 = sbr.rel (0) target = $region21
  $region20: #{bond2bond_forward.5} parent=0 // pred_region
    _
  $region21: #{bond2bond_forward.5} parent=0 // pred_fallthru
    _
  // Predicated region
  $region22: #{bond2bond_forward.5} parent=0 // pred_check
    _
  $region23: #{bond2bond_forward.5} parent=0 // pred_check_branch
    %31 = sbr.rel (0) target = $region25
  $region24: #{bond2bond_forward.5} parent=0 // pred_region
    _
  $region25: #{bond2bond_forward.5} parent=0 // pred_fallthru
    _
  // Predicated region
  $region26: #{bond2bond_forward.5} parent=0 // pred_check
    _
  $region27: #{bond2bond_forward.5} parent=0 // pred_check_branch
    %33 = sbr.rel (0) target = $region29
  $region28: #{bond2bond_forward.5} parent=0 // pred_region
    _
  $region29: #{bond2bond_forward.5} parent=0 // pred_fallthru
    _
  // Predicated region
  $region30: #{bond2bond_forward.5} parent=0 // pred_check
    _
  $region31: #{bond2bond_forward.5} parent=0 // pred_check_branch
    %35 = sbr.rel (0) target = $region33
  $region32: #{bond2bond_forward.5} parent=0 // pred_region
    _
  $region33: #{bond2bond_forward.5} parent=0 // pred_fallthru
    _
  // Predicated region
  $region34: #{bond2bond_forward.5} parent=0 // pred_check
    _
  $region35: #{bond2bond_forward.5} parent=0 // pred_check_branch
    %37 = sbr.rel (0) target = $region37
  $region36: #{bond2bond_forward.5} parent=0 // pred_region
    _
  $region37: #{bond2bond_forward.5} parent=0 // pred_fallthru
    _
  // Predicated region
  $region38: #{bond2bond_forward.5} parent=0 // pred_check
    _
  $region39: #{bond2bond_forward.5} parent=0 // pred_check_branch
    %39 = sbr.rel (0) target = $region41
  $region40: #{bond2bond_forward.5} parent=0 // pred_region
    _
  $region41: #{bond2bond_forward.5} parent=0 // pred_fallthru
    _
  // Predicated region
  $region42: #{bond2bond_forward.5} parent=0 // pred_check
    _
  $region43: #{bond2bond_forward.5} parent=0 // pred_check_branch
    %41 = sbr.rel (0) target = $region45
  $region44: #{bond2bond_forward.5} parent=0 // pred_region
    _
  $region45: #{bond2bond_forward.5} parent=0 // pred_fallthru
    _
  // Predicated region
  $region46: #{bond2bond_forward.5} parent=0 // pred_check
    _
  $region47: #{bond2bond_forward.5} parent=0 // pred_check_branch
    %43 = sbr.rel (0) target = $region49
  $region48: #{bond2bond_forward.5} parent=0 // pred_region
    _
  $region49: #{bond2bond_forward.5} parent=0 // pred_fallthru
    _
  // Predicated region
  $region50: #{bond2bond_forward.5} parent=0 // pred_check
    _
  $region51: #{bond2bond_forward.5} parent=0 // pred_check_branch
    %45 = sbr.rel (0) target = $region53
  $region52: #{bond2bond_forward.5} parent=0 // pred_region
    _
  $region53: #{bond2bond_forward.5} parent=0 // pred_fallthru
    _
  // Predicated region
  $region54: #{bond2bond_forward.5} parent=0 // pred_check
    _
  $region55: #{bond2bond_forward.5} parent=0 // pred_check_branch
    %47 = sbr.rel (0) target = $region57
  $region56: #{bond2bond_forward.5} parent=0 // pred_region
    _
  $region57: #{bond2bond_forward.5} parent=0 // pred_fallthru
    _
  // Predicated region
  $region58: #{bond2bond_forward.5} parent=0 // pred_check
    _
  $region59: #{bond2bond_forward.5} parent=0 // pred_check_branch
    %49 = sbr.rel (0) target = $region61
  $region60: #{bond2bond_forward.5} parent=0 // pred_region
    _
  $region61: #{bond2bond_forward.5} parent=0 // pred_fallthru
    _
  %v50 = vld [vmem:[%s1] sm:$0xff]
  %v51 = vld [vmem:[%s0] sm:$0xff]
  %vm52 = vcmp.gt.f32.partialorder %v50, 0.0
  %v53 = vsel %vm52, %v50, 1.0
  %v54 = vrcp.pop %v53
  %v55 = vmul.f32 %v51, %v54
  %v56 = vld [vmem:[%s3] sm:$0xff]
  %v57 = vld [vmem:[%s3 + $0x8] sm:$0xff]
  %v58 = vld [vmem:[%s3 + $0x10] sm:$0xff]
  %v59 = vld [vmem:[%s3 + $0x18] sm:$0xff]
  %v60 = vld [vmem:[%s3 + $0x20] sm:$0xff]
  %v61 = vld [vmem:[%s3 + $0x28] sm:$0xff]
  %v62 = vld [vmem:[%s3 + $0x30] sm:$0xff]
  %v63 = vld [vmem:[%s3 + $0x38] sm:$0xff]
  %v64 = vld [vmem:[%s3 + $0x40] sm:$0xff]
  %v65 = vld [vmem:[%s3 + $0x48] sm:$0xff]
  %v66 = vld [vmem:[%s3 + $0x50] sm:$0xff]
  %v67 = vld [vmem:[%s3 + $0x58] sm:$0xff]
  %v68 = vld [vmem:[%s3 + $0x60] sm:$0xff]
  %v69 = vld [vmem:[%s3 + $0x68] sm:$0xff]
  %v70 = vld [vmem:[%s3 + $0x70] sm:$0xff]
  %v71 = vld [vmem:[%s3 + $0x78] sm:$0xff]
  %v72 = vld [vmem:[%s4] sm:$0x1]
  %v74 = vlaneseq
  %v75 = vshrl.u32 %v74, 7
  %v76 = vsub.s32 0, %v75
  %v77 = vrot.slane %v72, %v76
  %79 = vmatprep.subr.mxu0 0.0
  %80 = vmatpush1.msra.mxu0 %v71
  %81 = vmatprep.subr.mxu0 0.0
  %82 = vmatpush1.msra.mxu0 %v70
  %83 = vmatprep.subr.mxu0 0.0
  %84 = vmatpush1.msra.mxu0 %v69
  %85 = vmatprep.subr.mxu0 0.0
  %86 = vmatpush1.msra.mxu0 %v68
  %87 = vmatprep.subr.mxu0 0.0
  %88 = vmatpush1.msra.mxu0 %v67
  %89 = vmatprep.subr.mxu0 0.0
  %90 = vmatpush1.msra.mxu0 %v66
  %91 = vmatprep.subr.mxu0 0.0
  %92 = vmatpush1.msra.mxu0 %v65
  %93 = vmatprep.subr.mxu0 0.0
  %94 = vmatpush1.msra.mxu0 %v64
  %95 = vmatprep.subr.mxu0 0.0
  %96 = vmatpush1.msra.mxu0 %v63
  %97 = vmatprep.subr.mxu0 0.0
  %98 = vmatpush1.msra.mxu0 %v62
  %99 = vmatprep.subr.mxu0 0.0
  %100 = vmatpush1.msra.mxu0 %v61
  %101 = vmatprep.subr.mxu0 0.0
  %102 = vmatpush1.msra.mxu0 %v60
  %103 = vmatprep.subr.mxu0 0.0
  %104 = vmatpush1.msra.mxu0 %v59
  %105 = vmatprep.subr.mxu0 0.0
  %106 = vmatpush1.msra.mxu0 %v58
  %107 = vmatprep.subr.mxu0 0.0
  %108 = vmatpush1.msra.mxu0 %v57
  %109 = vmatprep.subr.mxu0 0.0
  %110 = vmatpush1.msra.mxu0 %v56
  %111 = vmatprep.subr.mxu0 0.0
  %112 = vmatpush2.msra.mxu0 0.0
  %113 = vmatprep.subr.mxu0 0.0
  %114 = vmatpush2.msra.mxu0 0.0
  %115 = vmatprep.subr.mxu0 0.0
  %116 = vmatpush2.msra.mxu0 0.0
  %117 = vmatprep.subr.mxu0 0.0
  %118 = vmatpush2.msra.mxu0 0.0
  %119 = vmatprep.subr.mxu0 0.0
  %120 = vmatpush2.msra.mxu0 0.0
  %121 = vmatprep.subr.mxu0 0.0
  %122 = vmatpush2.msra.mxu0 0.0
  %123 = vmatprep.subr.mxu0 0.0
  %124 = vmatpush2.msra.mxu0 0.0
  %125 = vmatprep.subr.mxu0 0.0
  %126 = vmatpush2.msra.mxu0 0.0
  %127 = vmatprep.subr.mxu0 0.0
  %128 = vmatpush2.msra.mxu0 0.0
  %129 = vmatprep.subr.mxu0 0.0
  %130 = vmatpush2.msra.mxu0 0.0
  %131 = vmatprep.subr.mxu0 0.0
  %132 = vmatpush2.msra.mxu0 0.0
  %133 = vmatprep.subr.mxu0 0.0
  %134 = vmatpush2.msra.mxu0 0.0
  %135 = vmatprep.subr.mxu0 0.0
  %136 = vmatpush2.msra.mxu0 0.0
  %137 = vmatprep.subr.mxu0 0.0
  %138 = vmatpush2.msra.mxu0 0.0
  %139 = vmatprep.subr.mxu0 0.0
  %140 = vmatpush2.msra.mxu0 0.0
  %141 = vmatprep.subr.mxu0 0.0
  %142 = vmatpush2.msra.mxu0 0.0
  %143 = vmatprep.mubr.f32.mxu0 0.0
  %144 = vmatmul.mubr.f32.gmra.mxu0 %v55
  %v145 = vpop.f32.mrf.mxu0
  %v146 = vadd.f32 %v77, %v145
  %v147 = vpop.f32.mrf.mxu0
  %148 = vdwg.mxu0
  %v149 = vmax.f32 %v146, 0.0
  %v150 = vld [vmem:[%s5] sm:$0xff]
  %v151 = vld [vmem:[%s5 + $0x8] sm:$0xff]
  %v152 = vld [vmem:[%s5 + $0x10] sm:$0xff]
  %v153 = vld [vmem:[%s5 + $0x18] sm:$0xff]
  %v154 = vld [vmem:[%s5 + $0x20] sm:$0xff]
  %v155 = vld [vmem:[%s5 + $0x28] sm:$0xff]
  %v156 = vld [vmem:[%s5 + $0x30] sm:$0xff]
  %v157 = vld [vmem:[%s5 + $0x38] sm:$0xff]
  %v158 = vld [vmem:[%s5 + $0x40] sm:$0xff]
  %v159 = vld [vmem:[%s5 + $0x48] sm:$0xff]
  %v160 = vld [vmem:[%s5 + $0x50] sm:$0xff]
  %v161 = vld [vmem:[%s5 + $0x58] sm:$0xff]
  %v162 = vld [vmem:[%s5 + $0x60] sm:$0xff]
  %v163 = vld [vmem:[%s5 + $0x68] sm:$0xff]
  %v164 = vld [vmem:[%s5 + $0x70] sm:$0xff]
  %v165 = vld [vmem:[%s5 + $0x78] sm:$0xff]
  %v166 = vld [vmem:[%s6] sm:$0x1]
  %v168 = vlaneseq
  %v169 = vshrl.u32 %v168, 7
  %v170 = vsub.s32 0, %v169
  %v171 = vrot.slane %v166, %v170
  %173 = vmatprep.subr.mxu0 0.0
  %174 = vmatpush1.msra.mxu0 %v165
  %175 = vmatprep.subr.mxu0 0.0
  %176 = vmatpush1.msra.mxu0 %v164
  %177 = vmatprep.subr.mxu0 0.0
  %178 = vmatpush1.msra.mxu0 %v163
  %179 = vmatprep.subr.mxu0 0.0
  %180 = vmatpush1.msra.mxu0 %v162
  %181 = vmatprep.subr.mxu0 0.0
  %182 = vmatpush1.msra.mxu0 %v161
  %183 = vmatprep.subr.mxu0 0.0
  %184 = vmatpush1.msra.mxu0 %v160
  %185 = vmatprep.subr.mxu0 0.0
  %186 = vmatpush1.msra.mxu0 %v159
  %187 = vmatprep.subr.mxu0 0.0
  %188 = vmatpush1.msra.mxu0 %v158
  %189 = vmatprep.subr.mxu0 0.0
  %190 = vmatpush1.msra.mxu0 %v157
  %191 = vmatprep.subr.mxu0 0.0
  %192 = vmatpush1.msra.mxu0 %v156
  %193 = vmatprep.subr.mxu0 0.0
  %194 = vmatpush1.msra.mxu0 %v155
  %195 = vmatprep.subr.mxu0 0.0
  %196 = vmatpush1.msra.mxu0 %v154
  %197 = vmatprep.subr.mxu0 0.0
  %198 = vmatpush1.msra.mxu0 %v153
  %199 = vmatprep.subr.mxu0 0.0
  %200 = vmatpush1.msra.mxu0 %v152
  %201 = vmatprep.subr.mxu0 0.0
  %202 = vmatpush1.msra.mxu0 %v151
  %203 = vmatprep.subr.mxu0 0.0
  %204 = vmatpush1.msra.mxu0 %v150
  %205 = vmatprep.subr.mxu0 0.0
  %206 = vmatpush2.msra.mxu0 0.0
  %207 = vmatprep.subr.mxu0 0.0
  %208 = vmatpush2.msra.mxu0 0.0
  %209 = vmatprep.subr.mxu0 0.0
  %210 = vmatpush2.msra.mxu0 0.0
  %211 = vmatprep.subr.mxu0 0.0
  %212 = vmatpush2.msra.mxu0 0.0
  %213 = vmatprep.subr.mxu0 0.0
  %214 = vmatpush2.msra.mxu0 0.0
  %215 = vmatprep.subr.mxu0 0.0
  %216 = vmatpush2.msra.mxu0 0.0
  %217 = vmatprep.subr.mxu0 0.0
  %218 = vmatpush2.msra.mxu0 0.0
  %219 = vmatprep.subr.mxu0 0.0
  %220 = vmatpush2.msra.mxu0 0.0
  %221 = vmatprep.subr.mxu0 0.0
  %222 = vmatpush2.msra.mxu0 0.0
  %223 = vmatprep.subr.mxu0 0.0
  %224 = vmatpush2.msra.mxu0 0.0
  %225 = vmatprep.subr.mxu0 0.0
  %226 = vmatpush2.msra.mxu0 0.0
  %227 = vmatprep.subr.mxu0 0.0
  %228 = vmatpush2.msra.mxu0 0.0
  %229 = vmatprep.subr.mxu0 0.0
  %230 = vmatpush2.msra.mxu0 0.0
  %231 = vmatprep.subr.mxu0 0.0
  %232 = vmatpush2.msra.mxu0 0.0
  %233 = vmatprep.subr.mxu0 0.0
  %234 = vmatpush2.msra.mxu0 0.0
  %235 = vmatprep.subr.mxu0 0.0
  %236 = vmatpush2.msra.mxu0 0.0
  %237 = vmatprep.mubr.f32.mxu0 0.0
  %238 = vmatmul.mubr.f32.gmra.mxu0 %v149
  %v239 = vpop.f32.mrf.mxu0
  %v240 = vadd.f32 %v171, %v239
  %v241 = vpop.f32.mrf.mxu0
  %242 = vdwg.mxu0
  %v243 = vld [vmem:[%s2] sm:$0xff]
  %v244 = vadd.f32 %v240, %v243
  %v245 = vld [vmem:[%s7] sm:$0xff]
  %v246 = vld [vmem:[%s7 + $0x8] sm:$0xff]
  %v247 = vld [vmem:[%s7 + $0x10] sm:$0xff]
  %v248 = vld [vmem:[%s7 + $0x18] sm:$0xff]
  %v249 = vld [vmem:[%s7 + $0x20] sm:$0xff]
  %v250 = vld [vmem:[%s7 + $0x28] sm:$0xff]
  %v251 = vld [vmem:[%s7 + $0x30] sm:$0xff]
  %v252 = vld [vmem:[%s7 + $0x38] sm:$0xff]
  %v253 = vld [vmem:[%s7 + $0x40] sm:$0xff]
  %v254 = vld [vmem:[%s7 + $0x48] sm:$0xff]
  %v255 = vld [vmem:[%s7 + $0x50] sm:$0xff]
  %v256 = vld [vmem:[%s7 + $0x58] sm:$0xff]
  %v257 = vld [vmem:[%s7 + $0x60] sm:$0xff]
  %v258 = vld [vmem:[%s7 + $0x68] sm:$0xff]
  %v259 = vld [vmem:[%s7 + $0x70] sm:$0xff]
  %v260 = vld [vmem:[%s7 + $0x78] sm:$0xff]
  %v261 = vld [vmem:[%s8] sm:$0x1]
  %v263 = vlaneseq
  %v264 = vshrl.u32 %v263, 7
  %v265 = vsub.s32 0, %v264
  %v266 = vrot.slane %v261, %v265
  %268 = vmatprep.subr.mxu0 0.0
  %269 = vmatpush1.msra.mxu0 %v260
  %270 = vmatprep.subr.mxu0 0.0
  %271 = vmatpush1.msra.mxu0 %v259
  %272 = vmatprep.subr.mxu0 0.0
  %273 = vmatpush1.msra.mxu0 %v258
  %274 = vmatprep.subr.mxu0 0.0
  %275 = vmatpush1.msra.mxu0 %v257
  %276 = vmatprep.subr.mxu0 0.0
  %277 = vmatpush1.msra.mxu0 %v256
  %278 = vmatprep.subr.mxu0 0.0
  %279 = vmatpush1.msra.mxu0 %v255
  %280 = vmatprep.subr.mxu0 0.0
  %281 = vmatpush1.msra.mxu0 %v254
  %282 = vmatprep.subr.mxu0 0.0
  %283 = vmatpush1.msra.mxu0 %v253
  %284 = vmatprep.subr.mxu0 0.0
  %285 = vmatpush1.msra.mxu0 %v252
  %286 = vmatprep.subr.mxu0 0.0
  %287 = vmatpush1.msra.mxu0 %v251
  %288 = vmatprep.subr.mxu0 0.0
  %289 = vmatpush1.msra.mxu0 %v250
  %290 = vmatprep.subr.mxu0 0.0
  %291 = vmatpush1.msra.mxu0 %v249
  %292 = vmatprep.subr.mxu0 0.0
  %293 = vmatpush1.msra.mxu0 %v248
  %294 = vmatprep.subr.mxu0 0.0
  %295 = vmatpush1.msra.mxu0 %v247
  %296 = vmatprep.subr.mxu0 0.0
  %297 = vmatpush1.msra.mxu0 %v246
  %298 = vmatprep.subr.mxu0 0.0
  %299 = vmatpush1.msra.mxu0 %v245
  %300 = vmatprep.subr.mxu0 0.0
  %301 = vmatpush2.msra.mxu0 0.0
  %302 = vmatprep.subr.mxu0 0.0
  %303 = vmatpush2.msra.mxu0 0.0
  %304 = vmatprep.subr.mxu0 0.0
  %305 = vmatpush2.msra.mxu0 0.0
  %306 = vmatprep.subr.mxu0 0.0
  %307 = vmatpush2.msra.mxu0 0.0
  %308 = vmatprep.subr.mxu0 0.0
  %309 = vmatpush2.msra.mxu0 0.0
  %310 = vmatprep.subr.mxu0 0.0
  %311 = vmatpush2.msra.mxu0 0.0
  %312 = vmatprep.subr.mxu0 0.0
  %313 = vmatpush2.msra.mxu0 0.0
  %314 = vmatprep.subr.mxu0 0.0
  %315 = vmatpush2.msra.mxu0 0.0
  %316 = vmatprep.subr.mxu0 0.0
  %317 = vmatpush2.msra.mxu0 0.0
  %318 = vmatprep.subr.mxu0 0.0
  %319 = vmatpush2.msra.mxu0 0.0
  %320 = vmatprep.subr.mxu0 0.0
  %321 = vmatpush2.msra.mxu0 0.0
  %322 = vmatprep.subr.mxu0 0.0
  %323 = vmatpush2.msra.mxu0 0.0
  %324 = vmatprep.subr.mxu0 0.0
  %325 = vmatpush2.msra.mxu0 0.0
  %326 = vmatprep.subr.mxu0 0.0
  %327 = vmatpush2.msra.mxu0 0.0
  %328 = vmatprep.subr.mxu0 0.0
  %329 = vmatpush2.msra.mxu0 0.0
  %330 = vmatprep.subr.mxu0 0.0
  %331 = vmatpush2.msra.mxu0 0.0
  %332 = vmatprep.mubr.f32.mxu0 0.0
  %333 = vmatmul.mubr.f32.gmra.mxu0 %v244
  %v334 = vpop.f32.mrf.mxu0
  %v335 = vadd.f32 %v266, %v334
  %v336 = vpop.f32.mrf.mxu0
  %337 = vdwg.mxu0
  %v338 = vmax.f32 %v335, 0.0
  %v339 = vld [vmem:[%s9] sm:$0xff]
  %v340 = vld [vmem:[%s9 + $0x8] sm:$0xff]
  %v341 = vld [vmem:[%s9 + $0x10] sm:$0xff]
  %v342 = vld [vmem:[%s9 + $0x18] sm:$0xff]
  %v343 = vld [vmem:[%s9 + $0x20] sm:$0xff]
  %v344 = vld [vmem:[%s9 + $0x28] sm:$0xff]
  %v345 = vld [vmem:[%s9 + $0x30] sm:$0xff]
  %v346 = vld [vmem:[%s9 + $0x38] sm:$0xff]
  %v347 = vld [vmem:[%s9 + $0x40] sm:$0xff]
  %v348 = vld [vmem:[%s9 + $0x48] sm:$0xff]
  %v349 = vld [vmem:[%s9 + $0x50] sm:$0xff]
  %v350 = vld [vmem:[%s9 + $0x58] sm:$0xff]
  %v351 = vld [vmem:[%s9 + $0x60] sm:$0xff]
  %v352 = vld [vmem:[%s9 + $0x68] sm:$0xff]
  %v353 = vld [vmem:[%s9 + $0x70] sm:$0xff]
  %v354 = vld [vmem:[%s9 + $0x78] sm:$0xff]
  %v355 = vld [vmem:[%s10] sm:$0x1]
  %v357 = vlaneseq
  %v358 = vshrl.u32 %v357, 7
  %v359 = vsub.s32 0, %v358
  %v360 = vrot.slane %v355, %v359
  %362 = vmatprep.subr.mxu0 0.0
  %363 = vmatpush1.msra.mxu0 %v354
  %364 = vmatprep.subr.mxu0 0.0
  %365 = vmatpush1.msra.mxu0 %v353
  %366 = vmatprep.subr.mxu0 0.0
  %367 = vmatpush1.msra.mxu0 %v352
  %368 = vmatprep.subr.mxu0 0.0
  %369 = vmatpush1.msra.mxu0 %v351
  %370 = vmatprep.subr.mxu0 0.0
  %371 = vmatpush1.msra.mxu0 %v350
  %372 = vmatprep.subr.mxu0 0.0
  %373 = vmatpush1.msra.mxu0 %v349
  %374 = vmatprep.subr.mxu0 0.0
  %375 = vmatpush1.msra.mxu0 %v348
  %376 = vmatprep.subr.mxu0 0.0
  %377 = vmatpush1.msra.mxu0 %v347
  %378 = vmatprep.subr.mxu0 0.0
  %379 = vmatpush1.msra.mxu0 %v346
  %380 = vmatprep.subr.mxu0 0.0
  %381 = vmatpush1.msra.mxu0 %v345
  %382 = vmatprep.subr.mxu0 0.0
  %383 = vmatpush1.msra.mxu0 %v344
  %384 = vmatprep.subr.mxu0 0.0
  %385 = vmatpush1.msra.mxu0 %v343
  %386 = vmatprep.subr.mxu0 0.0
  %387 = vmatpush1.msra.mxu0 %v342
  %388 = vmatprep.subr.mxu0 0.0
  %389 = vmatpush1.msra.mxu0 %v341
  %390 = vmatprep.subr.mxu0 0.0
  %391 = vmatpush1.msra.mxu0 %v340
  %392 = vmatprep.subr.mxu0 0.0
  %393 = vmatpush1.msra.mxu0 %v339
  %394 = vmatprep.subr.mxu0 0.0
  %395 = vmatpush2.msra.mxu0 0.0
  %396 = vmatprep.subr.mxu0 0.0
  %397 = vmatpush2.msra.mxu0 0.0
  %398 = vmatprep.subr.mxu0 0.0
  %399 = vmatpush2.msra.mxu0 0.0
  %400 = vmatprep.subr.mxu0 0.0
  %401 = vmatpush2.msra.mxu0 0.0
  %402 = vmatprep.subr.mxu0 0.0
  %403 = vmatpush2.msra.mxu0 0.0
  %404 = vmatprep.subr.mxu0 0.0
  %405 = vmatpush2.msra.mxu0 0.0
  %406 = vmatprep.subr.mxu0 0.0
  %407 = vmatpush2.msra.mxu0 0.0
  %408 = vmatprep.subr.mxu0 0.0
  %409 = vmatpush2.msra.mxu0 0.0
  %410 = vmatprep.subr.mxu0 0.0
  %411 = vmatpush2.msra.mxu0 0.0
  %412 = vmatprep.subr.mxu0 0.0
  %413 = vmatpush2.msra.mxu0 0.0
  %414 = vmatprep.subr.mxu0 0.0
  %415 = vmatpush2.msra.mxu0 0.0
  %416 = vmatprep.subr.mxu0 0.0
  %417 = vmatpush2.msra.mxu0 0.0
  %418 = vmatprep.subr.mxu0 0.0
  %419 = vmatpush2.msra.mxu0 0.0
  %420 = vmatprep.subr.mxu0 0.0
  %421 = vmatpush2.msra.mxu0 0.0
  %422 = vmatprep.subr.mxu0 0.0
  %423 = vmatpush2.msra.mxu0 0.0
  %424 = vmatprep.subr.mxu0 0.0
  %425 = vmatpush2.msra.mxu0 0.0
  %426 = vmatprep.mubr.f32.mxu0 0.0
  %427 = vmatmul.mubr.f32.gmra.mxu0 %v338
  %v428 = vpop.f32.mrf.mxu0
  %v429 = vadd.f32 %v360, %v428
  %v430 = vpop.f32.mrf.mxu0
  %431 = vdwg.mxu0
  %v432 = vmax.f32 %v429, 0.0
  %v433 = vadd.f32 %v244, %v432
  %v434 = vld [vmem:[%s11] sm:$0xff]
  %v435 = vld [vmem:[%s11 + $0x8] sm:$0xff]
  %v436 = vld [vmem:[%s11 + $0x10] sm:$0xff]
  %v437 = vld [vmem:[%s11 + $0x18] sm:$0xff]
  %v438 = vld [vmem:[%s11 + $0x20] sm:$0xff]
  %v439 = vld [vmem:[%s11 + $0x28] sm:$0xff]
  %v440 = vld [vmem:[%s11 + $0x30] sm:$0xff]
  %v441 = vld [vmem:[%s11 + $0x38] sm:$0xff]
  %v442 = vld [vmem:[%s11 + $0x40] sm:$0xff]
  %v443 = vld [vmem:[%s11 + $0x48] sm:$0xff]
  %v444 = vld [vmem:[%s11 + $0x50] sm:$0xff]
  %v445 = vld [vmem:[%s11 + $0x58] sm:$0xff]
  %v446 = vld [vmem:[%s11 + $0x60] sm:$0xff]
  %v447 = vld [vmem:[%s11 + $0x68] sm:$0xff]
  %v448 = vld [vmem:[%s11 + $0x70] sm:$0xff]
  %v449 = vld [vmem:[%s11 + $0x78] sm:$0xff]
  %v450 = vld [vmem:[%s12] sm:$0x1]
  %v452 = vlaneseq
  %v453 = vshrl.u32 %v452, 7
  %v454 = vsub.s32 0, %v453
  %v455 = vrot.slane %v450, %v454
  %457 = vmatprep.subr.mxu0 0.0
  %458 = vmatpush1.msra.mxu0 %v449
  %459 = vmatprep.subr.mxu0 0.0
  %460 = vmatpush1.msra.mxu0 %v448
  %461 = vmatprep.subr.mxu0 0.0
  %462 = vmatpush1.msra.mxu0 %v447
  %463 = vmatprep.subr.mxu0 0.0
  %464 = vmatpush1.msra.mxu0 %v446
  %465 = vmatprep.subr.mxu0 0.0
  %466 = vmatpush1.msra.mxu0 %v445
  %467 = vmatprep.subr.mxu0 0.0
  %468 = vmatpush1.msra.mxu0 %v444
  %469 = vmatprep.subr.mxu0 0.0
  %470 = vmatpush1.msra.mxu0 %v443
  %471 = vmatprep.subr.mxu0 0.0
  %472 = vmatpush1.msra.mxu0 %v442
  %473 = vmatprep.subr.mxu0 0.0
  %474 = vmatpush1.msra.mxu0 %v441
  %475 = vmatprep.subr.mxu0 0.0
  %476 = vmatpush1.msra.mxu0 %v440
  %477 = vmatprep.subr.mxu0 0.0
  %478 = vmatpush1.msra.mxu0 %v439
  %479 = vmatprep.subr.mxu0 0.0
  %480 = vmatpush1.msra.mxu0 %v438
  %481 = vmatprep.subr.mxu0 0.0
  %482 = vmatpush1.msra.mxu0 %v437
  %483 = vmatprep.subr.mxu0 0.0
  %484 = vmatpush1.msra.mxu0 %v436
  %485 = vmatprep.subr.mxu0 0.0
  %486 = vmatpush1.msra.mxu0 %v435
  %487 = vmatprep.subr.mxu0 0.0
  %488 = vmatpush1.msra.mxu0 %v434
  %489 = vmatprep.subr.mxu0 0.0
  %490 = vmatpush2.msra.mxu0 0.0
  %491 = vmatprep.subr.mxu0 0.0
  %492 = vmatpush2.msra.mxu0 0.0
  %493 = vmatprep.subr.mxu0 0.0
  %494 = vmatpush2.msra.mxu0 0.0
  %495 = vmatprep.subr.mxu0 0.0
  %496 = vmatpush2.msra.mxu0 0.0
  %497 = vmatprep.subr.mxu0 0.0
  %498 = vmatpush2.msra.mxu0 0.0
  %499 = vmatprep.subr.mxu0 0.0
  %500 = vmatpush2.msra.mxu0 0.0
  %501 = vmatprep.subr.mxu0 0.0
  %502 = vmatpush2.msra.mxu0 0.0
  %503 = vmatprep.subr.mxu0 0.0
  %504 = vmatpush2.msra.mxu0 0.0
  %505 = vmatprep.subr.mxu0 0.0
  %506 = vmatpush2.msra.mxu0 0.0
  %507 = vmatprep.subr.mxu0 0.0
  %508 = vmatpush2.msra.mxu0 0.0
  %509 = vmatprep.subr.mxu0 0.0
  %510 = vmatpush2.msra.mxu0 0.0
  %511 = vmatprep.subr.mxu0 0.0
  %512 = vmatpush2.msra.mxu0 0.0
  %513 = vmatprep.subr.mxu0 0.0
  %514 = vmatpush2.msra.mxu0 0.0
  %515 = vmatprep.subr.mxu0 0.0
  %516 = vmatpush2.msra.mxu0 0.0
  %517 = vmatprep.subr.mxu0 0.0
  %518 = vmatpush2.msra.mxu0 0.0
  %519 = vmatprep.subr.mxu0 0.0
  %520 = vmatpush2.msra.mxu0 0.0
  %521 = vmatprep.mubr.f32.mxu0 0.0
  %522 = vmatmul.mubr.f32.gmra.mxu0 %v433
  %v523 = vpop.f32.mrf.mxu0
  %v524 = vadd.f32 %v455, %v523
  %v525 = vpop.f32.mrf.mxu0
  %526 = vdwg.mxu0
  %v527 = vmax.f32 %v524, 0.0
  %v528 = vld [vmem:[%s13] sm:$0xff]
  %v529 = vld [vmem:[%s13 + $0x8] sm:$0xff]
  %v530 = vld [vmem:[%s13 + $0x10] sm:$0xff]
  %v531 = vld [vmem:[%s13 + $0x18] sm:$0xff]
  %v532 = vld [vmem:[%s13 + $0x20] sm:$0xff]
  %v533 = vld [vmem:[%s13 + $0x28] sm:$0xff]
  %v534 = vld [vmem:[%s13 + $0x30] sm:$0xff]
  %v535 = vld [vmem:[%s13 + $0x38] sm:$0xff]
  %v536 = vld [vmem:[%s13 + $0x40] sm:$0xff]
  %v537 = vld [vmem:[%s13 + $0x48] sm:$0xff]
  %v538 = vld [vmem:[%s13 + $0x50] sm:$0xff]
  %v539 = vld [vmem:[%s13 + $0x58] sm:$0xff]
  %v540 = vld [vmem:[%s13 + $0x60] sm:$0xff]
  %v541 = vld [vmem:[%s13 + $0x68] sm:$0xff]
  %v542 = vld [vmem:[%s13 + $0x70] sm:$0xff]
  %v543 = vld [vmem:[%s13 + $0x78] sm:$0xff]
  %v544 = vld [vmem:[%s14] sm:$0x1]
  %v546 = vlaneseq
  %v547 = vshrl.u32 %v546, 7
  %v548 = vsub.s32 0, %v547
  %v549 = vrot.slane %v544, %v548
  %551 = vmatprep.subr.mxu0 0.0
  %552 = vmatpush1.msra.mxu0 %v543
  %553 = vmatprep.subr.mxu0 0.0
  %554 = vmatpush1.msra.mxu0 %v542
  %555 = vmatprep.subr.mxu0 0.0
  %556 = vmatpush1.msra.mxu0 %v541
  %557 = vmatprep.subr.mxu0 0.0
  %558 = vmatpush1.msra.mxu0 %v540
  %559 = vmatprep.subr.mxu0 0.0
  %560 = vmatpush1.msra.mxu0 %v539
  %561 = vmatprep.subr.mxu0 0.0
  %562 = vmatpush1.msra.mxu0 %v538
  %563 = vmatprep.subr.mxu0 0.0
  %564 = vmatpush1.msra.mxu0 %v537
  %565 = vmatprep.subr.mxu0 0.0
  %566 = vmatpush1.msra.mxu0 %v536
  %567 = vmatprep.subr.mxu0 0.0
  %568 = vmatpush1.msra.mxu0 %v535
  %569 = vmatprep.subr.mxu0 0.0
  %570 = vmatpush1.msra.mxu0 %v534
  %571 = vmatprep.subr.mxu0 0.0
  %572 = vmatpush1.msra.mxu0 %v533
  %573 = vmatprep.subr.mxu0 0.0
  %574 = vmatpush1.msra.mxu0 %v532
  %575 = vmatprep.subr.mxu0 0.0
  %576 = vmatpush1.msra.mxu0 %v531
  %577 = vmatprep.subr.mxu0 0.0
  %578 = vmatpush1.msra.mxu0 %v530
  %579 = vmatprep.subr.mxu0 0.0
  %580 = vmatpush1.msra.mxu0 %v529
  %581 = vmatprep.subr.mxu0 0.0
  %582 = vmatpush1.msra.mxu0 %v528
  %583 = vmatprep.subr.mxu0 0.0
  %584 = vmatpush2.msra.mxu0 0.0
  %585 = vmatprep.subr.mxu0 0.0
  %586 = vmatpush2.msra.mxu0 0.0
  %587 = vmatprep.subr.mxu0 0.0
  %588 = vmatpush2.msra.mxu0 0.0
  %589 = vmatprep.subr.mxu0 0.0
  %590 = vmatpush2.msra.mxu0 0.0
  %591 = vmatprep.subr.mxu0 0.0
  %592 = vmatpush2.msra.mxu0 0.0
  %593 = vmatprep.subr.mxu0 0.0
  %594 = vmatpush2.msra.mxu0 0.0
  %595 = vmatprep.subr.mxu0 0.0
  %596 = vmatpush2.msra.mxu0 0.0
  %597 = vmatprep.subr.mxu0 0.0
  %598 = vmatpush2.msra.mxu0 0.0
  %599 = vmatprep.subr.mxu0 0.0
  %600 = vmatpush2.msra.mxu0 0.0
  %601 = vmatprep.subr.mxu0 0.0
  %602 = vmatpush2.msra.mxu0 0.0
  %603 = vmatprep.subr.mxu0 0.0
  %604 = vmatpush2.msra.mxu0 0.0
  %605 = vmatprep.subr.mxu0 0.0
  %606 = vmatpush2.msra.mxu0 0.0
  %607 = vmatprep.subr.mxu0 0.0
  %608 = vmatpush2.msra.mxu0 0.0
  %609 = vmatprep.subr.mxu0 0.0
  %610 = vmatpush2.msra.mxu0 0.0
  %611 = vmatprep.subr.mxu0 0.0
  %612 = vmatpush2.msra.mxu0 0.0
  %613 = vmatprep.subr.mxu0 0.0
  %614 = vmatpush2.msra.mxu0 0.0
  %615 = vmatprep.mubr.f32.mxu0 0.0
  %616 = vmatmul.mubr.f32.gmra.mxu0 %v527
  %v617 = vpop.f32.mrf.mxu0
  %v618 = vadd.f32 %v549, %v617
  %v619 = vpop.f32.mrf.mxu0
  %620 = vdwg.mxu0
  %v621 = vmax.f32 %v618, 0.0
  %v622 = vadd.f32 %v433, %v621
  %623 = vst [vmem:[%s15] sm:$0xff] %v622
  // Predicated region
  $region62: #{bond2bond_forward.5} parent=0 // pred_check
    _
  $region63: #{bond2bond_forward.5} parent=0 // pred_check_branch
    %625 = sbr.rel (0) target = $region65
  $region64: #{bond2bond_forward.5} parent=0 // pred_region
    _
  $region65: #{bond2bond_forward.5} parent=0 // pred_fallthru
    _
  // Predicated region
  $region66: #{bond2bond_forward.5} parent=0 // pred_check
    _
  $region67: #{bond2bond_forward.5} parent=0 // pred_check_branch
    %627 = sbr.rel (0) target = $region69
  $region68: #{bond2bond_forward.5} parent=0 // pred_region
    _
  $region69: #{bond2bond_forward.5} parent=0 // pred_fallthru
    _

</llo_original>
